<compile_context>
chip_gen: v6e
topology: v6e:2x2x1
jax: 0.10.0
libtpu: 0.0.40
codegen_flags: <defaults>
</compile_context>

<pallas_src>
import functools

import jax
import jax.numpy as jnp
from jax import lax
from jax.experimental import pallas as pl
from jax.experimental.pallas import tpu as pltpu

LANE = 128
NEG_BIG = -1e30


# ----------------------------------------------------------------------------
# In-kernel helpers
# ----------------------------------------------------------------------------
def _softmax(x):
    m = jnp.max(x, axis=1, keepdims=True)
    e = jnp.exp(x - m)
    return e * pl.reciprocal(jnp.sum(e, axis=1, keepdims=True), approx=True)


def _argmax2d(x):
    # (B, C) float -> (B, 1) int32, index of first max (matches torch .max(1))
    maxv = jnp.max(x, axis=1, keepdims=True)
    col = lax.broadcasted_iota(jnp.int32, x.shape, 1)
    return jnp.min(jnp.where(x >= maxv, col, x.shape[1]), axis=1, keepdims=True)


def _sum_all(x):
    # full reduce to (1, 1), staged to keep reductions 2D-friendly
    return jnp.sum(jnp.sum(x, axis=1, keepdims=True), axis=0, keepdims=True)


# ----------------------------------------------------------------------------
# Fused training kernel: backbone (3 stacked views) + head
# ----------------------------------------------------------------------------
def _fused_train_kernel(x_ref, w1_ref, b1_ref, w2_ref, b2_ref, label_ref, ulabel_ref,
                        prob_ref, stats_ref,
                        *, batch, num_label, num_seen, eps):
    B = batch

    # ---- backbone for all three stacked views (3B rows): bf16 MXU, f32 accum --
    h = jnp.dot(x_ref[...], w1_ref[...], preferred_element_type=jnp.float32) + b1_ref[...]
    feat = jnp.maximum(h, 0.0)                                      # f32 (3B, E_pad)
    logits_all = jnp.dot(feat.astype(jnp.bfloat16), w2_ref[...],
                         preferred_element_type=jnp.float32) + b2_ref[...]

    logits = logits_all[:B]             # clean view
    lw = logits_all[B:2 * B]            # weak-aug view
    ls = logits_all[2 * B:]             # strong-aug view

    # ---- softmax of the clean view (returned) ----------------------------------
    prob = _softmax(logits)             # padded class lanes are exactly 0
    prob_ref[...] = prob

    # ---- supervised cross-entropy on the labeled slice (mean over rows) --------
    C_pad = logits.shape[1]
    lab_logits = logits[:num_label]
    label = label_ref[...]                                          # (nl, 1) int32
    onehot = lax.broadcasted_iota(jnp.int32, (num_label, C_pad), 1) == label
    m = jnp.max(lab_logits, axis=1, keepdims=True)
    lse = m + jnp.log(jnp.sum(jnp.exp(lab_logits - m), axis=1, keepdims=True))
    picked = jnp.sum(jnp.where(onehot, lab_logits, 0.0), axis=1, keepdims=True)
    sup = _sum_all(lse - picked) * (1.0 / num_label)

    # ---- entropy regularizer on the batch-mean prediction ----------------------
    pmean = jnp.sum(prob, axis=0, keepdims=True) * (1.0 / B)        # (1, C_pad)
    reg = -jnp.sum(pmean * jnp.log(pmean + eps), axis=1, keepdims=True)

    # ---- argmax consistency stats (argmax(softmax(x)) == argmax(x)) ------------
    top_w = _argmax2d(lw)                                           # (B, 1) int32
    top_s = _argmax2d(ls)

    lab_agree = (top_w[:num_label] == top_s[:num_label]) & (top_s[:num_label] < num_seen)
    label_seen = _sum_all(lab_agree.astype(jnp.float32)) * (1.0 / num_label)

    ul_w = top_w[num_label:]
    ul_s = top_s[num_label:]
    seen_mask = ulabel_ref[...] < num_seen                          # (B-nl, 1) bool
    cond = (ul_w == ul_s) & (ul_w < num_seen)
    num = _sum_all((cond & seen_mask).astype(jnp.float32))
    n_seen = _sum_all(seen_mask.astype(jnp.float32))
    n_unseen = float(B - num_label) - n_seen
    inv_seen = pl.reciprocal(jnp.maximum(n_seen, 1.0), approx=True)
    inv_unseen = pl.reciprocal(jnp.maximum(n_unseen, 1.0), approx=True)
    unlab_seen = jnp.where(n_seen > 0.0, num * inv_seen, 0.0)
    unlab_unseen = jnp.where(n_unseen > 0.0, num * inv_unseen, 0.0)

    # ---- pack the 5 scalars into one lane-dense (1, 128) output ----------------
    lane = lax.broadcasted_iota(jnp.int32, (1, LANE), 1)
    stats_ref[...] = (jnp.where(lane == 0, sup, 0.0)
                      + jnp.where(lane == 1, reg, 0.0)
                      + jnp.where(lane == 2, label_seen, 0.0)
                      + jnp.where(lane == 3, unlab_unseen, 0.0)
                      + jnp.where(lane == 4, unlab_seen, 0.0))


def fused_forward(x_all, w1, b1, w2, b2, label2d, ulabel2d,
                  *, batch, num_label, num_seen, eps):
    B = batch
    in_dim, E_pad = w1.shape
    C_pad = w2.shape[1]
    vmem = pl.BlockSpec(memory_space=pltpu.MemorySpace.VMEM)
    kern = functools.partial(_fused_train_kernel, batch=B, num_label=num_label,
                             num_seen=num_seen, eps=eps)
    flops = 2 * 3 * B * in_dim * E_pad + 2 * 3 * B * E_pad * C_pad
    transcendentals = 6 * B * C_pad + 2 * C_pad        # exps + logs (rough)
    bytes_accessed = (x_all.size * 2 + w1.size * 2 + w2.size * 2
                      + (b1.size + b2.size) * 4
                      + (label2d.size + ulabel2d.size) * 4
                      + (B * C_pad + LANE) * 4)
    # No grid: the whole problem (~1 MiB) sits in VMEM on all chip generations.
    return pl.pallas_call(
        kern,
        out_shape=(jax.ShapeDtypeStruct((B, C_pad), jnp.float32),
                   jax.ShapeDtypeStruct((1, LANE), jnp.float32)),
        in_specs=[vmem] * 7,
        out_specs=(vmem, vmem),
        cost_estimate=pl.CostEstimate(flops=flops, transcendentals=transcendentals,
                                      bytes_accessed=bytes_accessed),
    )(x_all, w1, b1, w2, b2, label2d, ulabel2d)


# ----------------------------------------------------------------------------
# Eval kernel: backbone (single view) + softmax
# ----------------------------------------------------------------------------
def _eval_kernel(x_ref, w1_ref, b1_ref, w2_ref, b2_ref, prob_ref):
    h = jnp.dot(x_ref[...], w1_ref[...], preferred_element_type=jnp.float32) + b1_ref[...]
    feat = jnp.maximum(h, 0.0)
    logits = jnp.dot(feat.astype(jnp.bfloat16), w2_ref[...],
                     preferred_element_type=jnp.float32) + b2_ref[...]
    prob_ref[...] = _softmax(logits)


def eval_forward(x, w1, b1, w2, b2):
    B = x.shape[0]
    C_pad = w2.shape[1]
    vmem = pl.BlockSpec(memory_space=pltpu.MemorySpace.VMEM)
    return pl.pallas_call(
        _eval_kernel,
        out_shape=jax.ShapeDtypeStruct((B, C_pad), jnp.float32),
        in_specs=[vmem] * 5,
        out_specs=vmem,
    )(x, w1, b1, w2, b2)


# ----------------------------------------------------------------------------
# Module wrapper
# ----------------------------------------------------------------------------
class ConsistencyPallas:
    def __init__(self, cfg, cfg_loss, num_classes, num_seen=5, key=None):
        self.threshold = 0.95
        self.eps = 1e-10
        self.num_classes = num_classes
        self.num_seen = num_seen
        self.pretrain_classifier_epoch = cfg['pretrain_classifier_epoch']
        self.n_mlp_layers = cfg['backbone']['n_mlp_layers']
        self.mlp_dim = cfg['backbone']['mlp_dim']
        self.output_dim = num_classes
        self.embeded_dim = cfg['backbone']['embeded_dim']
        self.in_dim = cfg['backbone']['in_dim']

        E, C = self.embeded_dim, num_classes
        self.e_pad = ((E + LANE - 1) // LANE) * LANE
        self.c_pad = ((C + LANE - 1) // LANE) * LANE

        key = jax.random.PRNGKey(0) if key is None else key
        k1, k2 = jax.random.split(key)
        # Synthetic deterministic backbone parameters (see TODO at top of file).
        w1 = jax.random.normal(k1, (self.in_dim, E), jnp.float32) / jnp.sqrt(float(self.in_dim))
        w2 = jax.random.normal(k2, (E, C), jnp.float32) / jnp.sqrt(float(E))
        # Lane-pad to 128 and store matmul operands in bf16 (f32 accumulation).
        self.w1 = jnp.pad(w1, ((0, 0), (0, self.e_pad - E))).astype(jnp.bfloat16)
        self.b1 = jnp.zeros((1, self.e_pad), jnp.float32)
        self.w2 = jnp.pad(w2, ((0, self.e_pad - E), (0, self.c_pad - C))).astype(jnp.bfloat16)
        # Padded class lanes get a huge negative bias so softmax/LSE/argmax ignore them.
        self.b2 = jnp.where(jnp.arange(self.c_pad)[None, :] < C, 0.0, NEG_BIG).astype(jnp.float32)

        self.training = True
        self.labeled_correct = 0
        self.unlabeled_correct = 0
        self.unlabeled_incorrect = 0

    def _flatten(self, img):
        # NCHW -> (b, C*H*W), bf16 MXU operand
        return img.reshape(img.shape[0], -1).astype(jnp.bfloat16)

    def forward(self, img, label, ulabel, aug_weak=None, aug_strong=None,
                iter=0, epoch=-1):
        b = img.shape[0]
        num_label = label.shape[0]

        # The backbone's feature width is a static property of the weights; the
        # original runtime assert on feat.shape[-1] is checked here statically.
        assert self.w1.shape[1] == self.e_pad and self.e_pad >= self.embeded_dim

        if not self.training:
            prob = eval_forward(self._flatten(img), self.w1, self.b1, self.w2, self.b2)
            return prob[:, :self.num_classes], None

        assert 0 < num_label < b, "kernel expects non-empty labeled and unlabeled slices"

        # Stack the three views so the backbone weights are DMA'd once; the
        # bf16 cast + reshape + concat fuse into a single XLA producer of x_all.
        x_all = jnp.concatenate([self._flatten(img), self._flatten(aug_weak),
                                 self._flatten(aug_strong)], axis=0)
        label2d = label.reshape(num_label, 1).astype(jnp.int32)
        ulabel2d = ulabel.reshape(b - num_label, 1).astype(jnp.int32)

        prob_pad, stats = fused_forward(
            x_all, self.w1, self.b1, self.w2, self.b2, label2d, ulabel2d,
            batch=b, num_label=num_label, num_seen=self.num_seen, eps=self.eps)

        prob_out = prob_pad[:, :self.num_classes]

        results = {'sup-loss': stats[0, 0]}
        if epoch > self.pretrain_classifier_epoch:
            results['reg-loss'] = stats[0, 1]
            results['label_seen'] = stats[0, 2]
            results['unlabel_unseen'] = stats[0, 3]
            results['unlabel_seen'] = stats[0, 4]
        return prob_out, results


# ----------------------------------------------------------------------------
if __name__ == "__main__":
    key = jax.random.PRNGKey(0)
    b, c, h, w = 8, 3, 32, 32
    num_classes, num_seen, num_label = 8, 5, 4

    cfg = {
        'pretrain_classifier_epoch': 0,
        'backbone': {
            'name': 'synthetic',
            'n_mlp_layers': 1,
            'mlp_dim': 64,
            'is_freeze': False,
            'embeded_dim': 64,       # synthetic feature width
            'in_dim': c * h * w,
        },
    }
    model = ConsistencyPallas(cfg, cfg_loss={}, num_classes=num_classes,
                              num_seen=num_seen)

    k1, k2, k3, k4 = jax.random.split(key, 4)
    img = jax.random.normal(k1, (b, c, h, w), jnp.float32)
    aug_weak = img + 0.01 * jax.random.normal(k2, (b, c, h, w), jnp.float32)
    aug_strong = img + 0.10 * jax.random.normal(k3, (b, c, h, w), jnp.float32)
    label = jax.random.randint(k4, (num_label,), 0, num_classes, jnp.int32)
    # unlabeled ground-truth ids: mix of seen (<5) and unseen (>=5) classes
    ulabel = jnp.array([1, 3, 6, 7], jnp.int32)

    # training path (fused kernel)
    prob_out, results = model.forward(img, label, ulabel, aug_weak, aug_strong,
                                      iter=0, epoch=3)
    jax.block_until_ready(prob_out)
    for v in results.values():
        jax.block_until_ready(v)

    # eval path (single-view kernel)
    model.training = False
    prob_eval, _ = model.forward(img, label, ulabel)
    jax.block_until_ready(prob_eval)
    model.training = True

    print("KERNEL_OK")
</pallas_src>

<mosaic_0001>
module attributes {stable_mosaic.version = 11 : i64} {
  func.func @_fused_train_kernel(%arg0: memref<24x3072xbf16, #tpu.memory_space<vmem>>, %arg1: memref<3072x128xbf16, #tpu.memory_space<vmem>>, %arg2: memref<1x128xf32, #tpu.memory_space<vmem>>, %arg3: memref<128x128xbf16, #tpu.memory_space<vmem>>, %arg4: memref<1x128xf32, #tpu.memory_space<vmem>>, %arg5: memref<4x1xi32, #tpu.memory_space<vmem>>, %arg6: memref<4x1xi32, #tpu.memory_space<vmem>>, %arg7: memref<8x128xf32, #tpu.memory_space<vmem>>, %arg8: memref<1x128xf32, #tpu.memory_space<vmem>>) attributes {dimension_semantics = [], scalar_prefetch = 0 : i64, scratch_operands = 0 : i64, tpu.core_type = #tpu.core_type<tc>} {
    %c0 = arith.constant 0 : index
    %c0_0 = arith.constant 0 : index
    %0 = vector.load %arg0[%c0, %c0_0] : memref<24x3072xbf16, #tpu.memory_space<vmem>>, vector<24x3072xbf16>
    %c0_1 = arith.constant 0 : index
    %c0_2 = arith.constant 0 : index
    %1 = vector.load %arg1[%c0_1, %c0_2] : memref<3072x128xbf16, #tpu.memory_space<vmem>>, vector<3072x128xbf16>
    %cst = arith.constant dense<0.000000e+00> : vector<24x128xf32>
    %2 = tpu.matmul %0, %1, %cst {dimension_numbers = #tpu.dot_dimension_numbers<[1], [0], [0], [1], [0, 0, 1, 1], [], []>} : vector<24x3072xbf16>, vector<3072x128xbf16>, vector<24x128xf32> -> vector<24x128xf32>
    %c0_3 = arith.constant 0 : index
    %c0_4 = arith.constant 0 : index
    %3 = vector.load %arg2[%c0_3, %c0_4] : memref<1x128xf32, #tpu.memory_space<vmem>>, vector<1x128xf32>
    %4 = vector.broadcast %3 : vector<1x128xf32> to vector<24x128xf32>
    %5 = arith.addf %2, %4 : vector<24x128xf32>
    %cst_5 = arith.constant 0.000000e+00 : f32
    %6 = vector.broadcast %cst_5 : f32 to vector<24x128xf32>
    %7 = arith.maximumf %5, %6 : vector<24x128xf32>
    %8 = arith.truncf %7 : vector<24x128xf32> to vector<24x128xbf16>
    %c0_6 = arith.constant 0 : index
    %c0_7 = arith.constant 0 : index
    %9 = vector.load %arg3[%c0_6, %c0_7] : memref<128x128xbf16, #tpu.memory_space<vmem>>, vector<128x128xbf16>
    %cst_8 = arith.constant dense<0.000000e+00> : vector<24x128xf32>
    %10 = tpu.matmul %8, %9, %cst_8 {dimension_numbers = #tpu.dot_dimension_numbers<[1], [0], [0], [1], [0, 0, 1, 1], [], []>} : vector<24x128xbf16>, vector<128x128xbf16>, vector<24x128xf32> -> vector<24x128xf32>
    %c0_9 = arith.constant 0 : index
    %c0_10 = arith.constant 0 : index
    %11 = vector.load %arg4[%c0_9, %c0_10] : memref<1x128xf32, #tpu.memory_space<vmem>>, vector<1x128xf32>
    %12 = vector.broadcast %11 : vector<1x128xf32> to vector<24x128xf32>
    %13 = arith.addf %10, %12 : vector<24x128xf32>
    %14 = vector.extract_strided_slice %13 {offsets = [0, 0], sizes = [8, 128], strides = [1, 1]} : vector<24x128xf32> to vector<8x128xf32>
    %15 = vector.extract_strided_slice %13 {offsets = [8, 0], sizes = [8, 128], strides = [1, 1]} : vector<24x128xf32> to vector<8x128xf32>
    %16 = vector.extract_strided_slice %13 {offsets = [16, 0], sizes = [8, 128], strides = [1, 1]} : vector<24x128xf32> to vector<8x128xf32>
    %cst_11 = arith.constant dense<0xFF800000> : vector<8xf32>
    %17 = vector.multi_reduction <maximumf>, %14, %cst_11 [1] : vector<8x128xf32> to vector<8xf32>
    %18 = vector.shape_cast %17 : vector<8xf32> to vector<8x1xf32>
    %19 = vector.broadcast %18 : vector<8x1xf32> to vector<8x128xf32>
    %20 = arith.subf %14, %19 : vector<8x128xf32>
    %21 = math.exp %20 : vector<8x128xf32>
    %cst_12 = arith.constant dense<0.000000e+00> : vector<8xf32>
    %22 = vector.multi_reduction <add>, %21, %cst_12 [1] : vector<8x128xf32> to vector<8xf32>
    %23 = vector.shape_cast %22 : vector<8xf32> to vector<8x1xf32>
    %24 = tpu.reciprocal %23 {approx = true} : vector<8x1xf32> -> vector<8x1xf32>
    %25 = vector.broadcast %24 : vector<8x1xf32> to vector<8x128xf32>
    %26 = arith.mulf %21, %25 : vector<8x128xf32>
    %c0_13 = arith.constant 0 : index
    %c0_14 = arith.constant 0 : index
    %27 = vector.load %arg7[%c0_13, %c0_14] : memref<8x128xf32, #tpu.memory_space<vmem>>, vector<8x128xf32>
    tpu.vector_store %arg7[%c0_13, %c0_14], %26 {strides = array<i32>} : memref<8x128xf32, #tpu.memory_space<vmem>>, vector<8x128xf32>,
    %28 = vector.extract_strided_slice %14 {offsets = [0, 0], sizes = [4, 128], strides = [1, 1]} : vector<8x128xf32> to vector<4x128xf32>
    %c0_15 = arith.constant 0 : index
    %c0_16 = arith.constant 0 : index
    %29 = vector.load %arg5[%c0_15, %c0_16] : memref<4x1xi32, #tpu.memory_space<vmem>>, vector<4x1xi32>
    %30 = tpu.iota {dimensions = array<i32: 1>} : vector<4x128xi32>
    %31 = vector.broadcast %29 : vector<4x1xi32> to vector<4x128xi32>
    %32 = arith.cmpi eq, %30, %31 : vector<4x128xi32>
    %cst_17 = arith.constant dense<0xFF800000> : vector<4xf32>
    %33 = vector.multi_reduction <maximumf>, %28, %cst_17 [1] : vector<4x128xf32> to vector<4xf32>
    %34 = vector.shape_cast %33 : vector<4xf32> to vector<4x1xf32>
    %35 = vector.broadcast %34 : vector<4x1xf32> to vector<4x128xf32>
    %36 = arith.subf %28, %35 : vector<4x128xf32>
    %37 = math.exp %36 : vector<4x128xf32>
    %cst_18 = arith.constant dense<0.000000e+00> : vector<4xf32>
    %38 = vector.multi_reduction <add>, %37, %cst_18 [1] : vector<4x128xf32> to vector<4xf32>
    %39 = vector.shape_cast %38 : vector<4xf32> to vector<4x1xf32>
    %40 = math.log %39 : vector<4x1xf32>
    %41 = arith.addf %34, %40 : vector<4x1xf32>
    %cst_19 = arith.constant 0.000000e+00 : f32
    %42 = vector.broadcast %cst_19 : f32 to vector<4x128xf32>
    %43 = arith.select %32, %28, %42 : vector<4x128xi1>, vector<4x128xf32>
    %cst_20 = arith.constant dense<0.000000e+00> : vector<4xf32>
    %44 = vector.multi_reduction <add>, %43, %cst_20 [1] : vector<4x128xf32> to vector<4xf32>
    %45 = vector.shape_cast %44 : vector<4xf32> to vector<4x1xf32>
    %46 = arith.subf %41, %45 : vector<4x1xf32>
    %cst_21 = arith.constant dense<0.000000e+00> : vector<4xf32>
    %47 = vector.multi_reduction <add>, %46, %cst_21 [1] : vector<4x1xf32> to vector<4xf32>
    %48 = vector.shape_cast %47 : vector<4xf32> to vector<4x1xf32>
    %cst_22 = arith.constant dense<0.000000e+00> : vector<1xf32>
    %49 = vector.multi_reduction <add>, %48, %cst_22 [0] : vector<4x1xf32> to vector<1xf32>
    %50 = vector.shape_cast %49 : vector<1xf32> to vector<1x1xf32>
    %cst_23 = arith.constant 2.500000e-01 : f32
    %51 = vector.broadcast %cst_23 : f32 to vector<1x1xf32>
    %52 = arith.mulf %50, %51 : vector<1x1xf32>
    %cst_24 = arith.constant dense<0.000000e+00> : vector<128xf32>
    %53 = vector.multi_reduction <add>, %26, %cst_24 [0] : vector<8x128xf32> to vector<128xf32>
    %54 = vector.shape_cast %53 : vector<128xf32> to vector<1x128xf32>
    %cst_25 = arith.constant 1.250000e-01 : f32
    %55 = vector.broadcast %cst_25 : f32 to vector<1x128xf32>
    %56 = arith.mulf %54, %55 : vector<1x128xf32>
    %cst_26 = arith.constant 1.000000e-10 : f32
    %57 = vector.broadcast %cst_26 : f32 to vector<1x128xf32>
    %58 = arith.addf %56, %57 : vector<1x128xf32>
    %59 = math.log %58 : vector<1x128xf32>
    %60 = arith.mulf %56, %59 : vector<1x128xf32>
    %cst_27 = arith.constant dense<0.000000e+00> : vector<1xf32>
    %61 = vector.multi_reduction <add>, %60, %cst_27 [1] : vector<1x128xf32> to vector<1xf32>
    %62 = vector.shape_cast %61 : vector<1xf32> to vector<1x1xf32>
    %cst_28 = arith.constant 0.000000e+00 : f32
    %63 = vector.broadcast %cst_28 : f32 to vector<1x1xf32>
    %64 = arith.subf %63, %62 : vector<1x1xf32>
    %cst_29 = arith.constant dense<0xFF800000> : vector<8xf32>
    %65 = vector.multi_reduction <maximumf>, %15, %cst_29 [1] : vector<8x128xf32> to vector<8xf32>
    %66 = vector.shape_cast %65 : vector<8xf32> to vector<8x1xf32>
    %67 = tpu.iota {dimensions = array<i32: 1>} : vector<8x128xi32>
    %68 = vector.broadcast %66 : vector<8x1xf32> to vector<8x128xf32>
    %69 = arith.cmpf oge, %15, %68 : vector<8x128xf32>
    %c128_i32 = arith.constant 128 : i32
    %70 = vector.broadcast %c128_i32 : i32 to vector<8x128xi32>
    %71 = arith.select %69, %67, %70 : vector<8x128xi1>, vector<8x128xi32>
    %cst_30 = arith.constant dense<2147483647> : vector<8xi32>
    %72 = vector.multi_reduction <minsi>, %71, %cst_30 [1] : vector<8x128xi32> to vector<8xi32>
    %73 = vector.shape_cast %72 : vector<8xi32> to vector<8x1xi32>
    %cst_31 = arith.constant dense<0xFF800000> : vector<8xf32>
    %74 = vector.multi_reduction <maximumf>, %16, %cst_31 [1] : vector<8x128xf32> to vector<8xf32>
    %75 = vector.shape_cast %74 : vector<8xf32> to vector<8x1xf32>
    %76 = tpu.iota {dimensions = array<i32: 1>} : vector<8x128xi32>
    %77 = vector.broadcast %75 : vector<8x1xf32> to vector<8x128xf32>
    %78 = arith.cmpf oge, %16, %77 : vector<8x128xf32>
    %c128_i32_32 = arith.constant 128 : i32
    %79 = vector.broadcast %c128_i32_32 : i32 to vector<8x128xi32>
    %80 = arith.select %78, %76, %79 : vector<8x128xi1>, vector<8x128xi32>
    %cst_33 = arith.constant dense<2147483647> : vector<8xi32>
    %81 = vector.multi_reduction <minsi>, %80, %cst_33 [1] : vector<8x128xi32> to vector<8xi32>
    %82 = vector.shape_cast %81 : vector<8xi32> to vector<8x1xi32>
    %83 = vector.extract_strided_slice %73 {offsets = [0, 0], sizes = [4, 1], strides = [1, 1]} : vector<8x1xi32> to vector<4x1xi32>
    %84 = vector.extract_strided_slice %82 {offsets = [0, 0], sizes = [4, 1], strides = [1, 1]} : vector<8x1xi32> to vector<4x1xi32>
    %85 = arith.cmpi eq, %83, %84 : vector<4x1xi32>
    %86 = vector.extract_strided_slice %82 {offsets = [0, 0], sizes = [4, 1], strides = [1, 1]} : vector<8x1xi32> to vector<4x1xi32>
    %c5_i32 = arith.constant 5 : i32
    %87 = vector.broadcast %c5_i32 : i32 to vector<4x1xi32>
    %88 = arith.cmpi slt, %86, %87 : vector<4x1xi32>
    %89 = arith.andi %85, %88 : vector<4x1xi1>
    %90 = arith.extui %89 : vector<4x1xi1> to vector<4x1xi32>
    %91 = arith.sitofp %90 : vector<4x1xi32> to vector<4x1xf32>
    %cst_34 = arith.constant dense<0.000000e+00> : vector<4xf32>
    %92 = vector.multi_reduction <add>, %91, %cst_34 [1] : vector<4x1xf32> to vector<4xf32>
    %93 = vector.shape_cast %92 : vector<4xf32> to vector<4x1xf32>
    %cst_35 = arith.constant dense<0.000000e+00> : vector<1xf32>
    %94 = vector.multi_reduction <add>, %93, %cst_35 [0] : vector<4x1xf32> to vector<1xf32>
    %95 = vector.shape_cast %94 : vector<1xf32> to vector<1x1xf32>
    %cst_36 = arith.constant 2.500000e-01 : f32
    %96 = vector.broadcast %cst_36 : f32 to vector<1x1xf32>
    %97 = arith.mulf %95, %96 : vector<1x1xf32>
    %98 = vector.extract_strided_slice %73 {offsets = [4, 0], sizes = [4, 1], strides = [1, 1]} : vector<8x1xi32> to vector<4x1xi32>
    %99 = vector.extract_strided_slice %82 {offsets = [4, 0], sizes = [4, 1], strides = [1, 1]} : vector<8x1xi32> to vector<4x1xi32>
    %c0_37 = arith.constant 0 : index
    %c0_38 = arith.constant 0 : index
    %100 = vector.load %arg6[%c0_37, %c0_38] : memref<4x1xi32, #tpu.memory_space<vmem>>, vector<4x1xi32>
    %c5_i32_39 = arith.constant 5 : i32
    %101 = vector.broadcast %c5_i32_39 : i32 to vector<4x1xi32>
    %102 = arith.cmpi slt, %100, %101 : vector<4x1xi32>
    %103 = arith.cmpi eq, %98, %99 : vector<4x1xi32>
    %c5_i32_40 = arith.constant 5 : i32
    %104 = vector.broadcast %c5_i32_40 : i32 to vector<4x1xi32>
    %105 = arith.cmpi slt, %98, %104 : vector<4x1xi32>
    %106 = arith.andi %103, %105 : vector<4x1xi1>
    %107 = arith.andi %106, %102 : vector<4x1xi1>
    %108 = arith.extui %107 : vector<4x1xi1> to vector<4x1xi32>
    %109 = arith.sitofp %108 : vector<4x1xi32> to vector<4x1xf32>
    %cst_41 = arith.constant dense<0.000000e+00> : vector<4xf32>
    %110 = vector.multi_reduction <add>, %109, %cst_41 [1] : vector<4x1xf32> to vector<4xf32>
    %111 = vector.shape_cast %110 : vector<4xf32> to vector<4x1xf32>
    %cst_42 = arith.constant dense<0.000000e+00> : vector<1xf32>
    %112 = vector.multi_reduction <add>, %111, %cst_42 [0] : vector<4x1xf32> to vector<1xf32>
    %113 = vector.shape_cast %112 : vector<1xf32> to vector<1x1xf32>
    %114 = arith.extui %102 : vector<4x1xi1> to vector<4x1xi32>
    %115 = arith.sitofp %114 : vector<4x1xi32> to vector<4x1xf32>
    %cst_43 = arith.constant dense<0.000000e+00> : vector<4xf32>
    %116 = vector.multi_reduction <add>, %115, %cst_43 [1] : vector<4x1xf32> to vector<4xf32>
    %117 = vector.shape_cast %116 : vector<4xf32> to vector<4x1xf32>
    %cst_44 = arith.constant dense<0.000000e+00> : vector<1xf32>
    %118 = vector.multi_reduction <add>, %117, %cst_44 [0] : vector<4x1xf32> to vector<1xf32>
    %119 = vector.shape_cast %118 : vector<1xf32> to vector<1x1xf32>
    %cst_45 = arith.constant 4.000000e+00 : f32
    %120 = vector.broadcast %cst_45 : f32 to vector<1x1xf32>
    %121 = arith.subf %120, %119 : vector<1x1xf32>
    %cst_46 = arith.constant 1.000000e+00 : f32
    %122 = vector.broadcast %cst_46 : f32 to vector<1x1xf32>
    %123 = arith.maximumf %119, %122 : vector<1x1xf32>
    %124 = tpu.reciprocal %123 {approx = true} : vector<1x1xf32> -> vector<1x1xf32>
    %cst_47 = arith.constant 1.000000e+00 : f32
    %125 = vector.broadcast %cst_47 : f32 to vector<1x1xf32>
    %126 = arith.maximumf %121, %125 : vector<1x1xf32>
    %127 = tpu.reciprocal %126 {approx = true} : vector<1x1xf32> -> vector<1x1xf32>
    %cst_48 = arith.constant 0.000000e+00 : f32
    %128 = vector.broadcast %cst_48 : f32 to vector<1x1xf32>
    %129 = arith.cmpf ogt, %119, %128 : vector<1x1xf32>
    %130 = arith.mulf %113, %124 : vector<1x1xf32>
    %cst_49 = arith.constant 0.000000e+00 : f32
    %131 = vector.broadcast %cst_49 : f32 to vector<1x1xf32>
    %132 = arith.select %129, %130, %131 : vector<1x1xi1>, vector<1x1xf32>
    %cst_50 = arith.constant 0.000000e+00 : f32
    %133 = vector.broadcast %cst_50 : f32 to vector<1x1xf32>
    %134 = arith.cmpf ogt, %121, %133 : vector<1x1xf32>
    %135 = arith.mulf %113, %127 : vector<1x1xf32>
    %cst_51 = arith.constant 0.000000e+00 : f32
    %136 = vector.broadcast %cst_51 : f32 to vector<1x1xf32>
    %137 = arith.select %134, %135, %136 : vector<1x1xi1>, vector<1x1xf32>
    %138 = tpu.iota {dimensions = array<i32: 1>} : vector<1x128xi32>
    %c0_i32 = arith.constant 0 : i32
    %139 = vector.broadcast %c0_i32 : i32 to vector<1x128xi32>
    %140 = arith.cmpi eq, %138, %139 : vector<1x128xi32>
    %cst_52 = arith.constant 0.000000e+00 : f32
    %141 = vector.shape_cast %52 : vector<1x1xf32> to vector<1x1xf32>
    %142 = vector.broadcast %141 : vector<1x1xf32> to vector<1x128xf32>
    %143 = vector.broadcast %cst_52 : f32 to vector<1x128xf32>
    %144 = arith.select %140, %142, %143 : vector<1x128xi1>, vector<1x128xf32>
    %c1_i32 = arith.constant 1 : i32
    %145 = vector.broadcast %c1_i32 : i32 to vector<1x128xi32>
    %146 = arith.cmpi eq, %138, %145 : vector<1x128xi32>
    %cst_53 = arith.constant 0.000000e+00 : f32
    %147 = vector.shape_cast %64 : vector<1x1xf32> to vector<1x1xf32>
    %148 = vector.broadcast %147 : vector<1x1xf32> to vector<1x128xf32>
    %149 = vector.broadcast %cst_53 : f32 to vector<1x128xf32>
    %150 = arith.select %146, %148, %149 : vector<1x128xi1>, vector<1x128xf32>
    %151 = arith.addf %144, %150 : vector<1x128xf32>
    %c2_i32 = arith.constant 2 : i32
    %152 = vector.broadcast %c2_i32 : i32 to vector<1x128xi32>
    %153 = arith.cmpi eq, %138, %152 : vector<1x128xi32>
    %cst_54 = arith.constant 0.000000e+00 : f32
    %154 = vector.shape_cast %97 : vector<1x1xf32> to vector<1x1xf32>
    %155 = vector.broadcast %154 : vector<1x1xf32> to vector<1x128xf32>
    %156 = vector.broadcast %cst_54 : f32 to vector<1x128xf32>
    %157 = arith.select %153, %155, %156 : vector<1x128xi1>, vector<1x128xf32>
    %158 = arith.addf %151, %157 : vector<1x128xf32>
    %c3_i32 = arith.constant 3 : i32
    %159 = vector.broadcast %c3_i32 : i32 to vector<1x128xi32>
    %160 = arith.cmpi eq, %138, %159 : vector<1x128xi32>
    %cst_55 = arith.constant 0.000000e+00 : f32
    %161 = vector.shape_cast %137 : vector<1x1xf32> to vector<1x1xf32>
    %162 = vector.broadcast %161 : vector<1x1xf32> to vector<1x128xf32>
    %163 = vector.broadcast %cst_55 : f32 to vector<1x128xf32>
    %164 = arith.select %160, %162, %163 : vector<1x128xi1>, vector<1x128xf32>
    %165 = arith.addf %158, %164 : vector<1x128xf32>
    %c4_i32 = arith.constant 4 : i32
    %166 = vector.broadcast %c4_i32 : i32 to vector<1x128xi32>
    %167 = arith.cmpi eq, %138, %166 : vector<1x128xi32>
    %cst_56 = arith.constant 0.000000e+00 : f32
    %168 = vector.shape_cast %132 : vector<1x1xf32> to vector<1x1xf32>
    %169 = vector.broadcast %168 : vector<1x1xf32> to vector<1x128xf32>
    %170 = vector.broadcast %cst_56 : f32 to vector<1x128xf32>
    %171 = arith.select %167, %169, %170 : vector<1x128xi1>, vector<1x128xf32>
    %172 = arith.addf %165, %171 : vector<1x128xf32>
    %c0_57 = arith.constant 0 : index
    %c0_58 = arith.constant 0 : index
    %173 = vector.load %arg8[%c0_57, %c0_58] : memref<1x128xf32, #tpu.memory_space<vmem>>, vector<1x128xf32>
    tpu.vector_store %arg8[%c0_57, %c0_58], %172 {strides = array<i32>} : memref<1x128xf32, #tpu.memory_space<vmem>>, vector<1x128xf32>,
    return
  }
}

</mosaic_0001>

<llo_original>
// kernel: tpu_custom_call.1
$region0: #{tpu_custom_call.1}
  #allocation0 [shape = 'u32[]', space=smem, size = 0x4, offset = 0x4, fixed_abs, tag = 'smem constant byte address 0x4 - core index']
  #allocation1 [shape = 'u32[144,128]{1,0:T(1,128)}', space=vmem, size = 0x12000, scoped, tag = 'internal scratch']
  %s0 = inlined_call_operand.hbm [shape: bf16[24,3072], index: 0, kind: input, shape index: {}]
  %s1 = inlined_call_operand.hbm [shape: bf16[3072,128], index: 1, kind: input, shape index: {}]
  %s2 = inlined_call_operand.vmem [shape: f32[1,128], index: 2, kind: input, shape index: {}]
  %s3 = inlined_call_operand.hbm [shape: bf16[128,128], index: 3, kind: input, shape index: {}]
  %s4 = inlined_call_operand.vmem [shape: f32[1,128], index: 4, kind: input, shape index: {}]
  %s5 = inlined_call_operand.vmem [shape: s32[4,1], index: 5, kind: input, shape index: {}]
  %s6 = inlined_call_operand.vmem [shape: s32[4,1], index: 6, kind: input, shape index: {}]
  %s7 = inlined_call_operand.hbm [shape: f32[8,128], index: 7, kind: output, shape index: {0}]
  %s8 = inlined_call_operand.hbm [shape: f32[1,128], index: 8, kind: output, shape index: {1}]
  %9 = xla_tuple %s7, %s8
  %s10 = sld [smem:[#allocation0]]
  $region58: #{tpu_custom_call.1} parent=0
    _
  %s12 = ssub.s32 1, %s10
  %s13 = scalar_select 0, %s12, %s10
  $region1: #{tpu_custom_call.1} parent=0
    #allocation2 [shape = 'u8[147456]{0}', space=vmem, size = 0x24000, scoped, tag = 'input window, operand 0, single buffered']
    #allocation3 [shape = 's32[1]{0}', space=sflag, size = 0x4, scoped, tag = 'scoped memory for tpu_custom_call.1']
    #allocation4 [shape = 's32[1]{0}', space=sflag, size = 0x4, scoped, tag = 'scoped memory for tpu_custom_call.1']
    #allocation5 [shape = 'u8[786432]{0}', space=vmem, size = 0xc0000, scoped, tag = 'input window, operand 1, single buffered']
    #allocation6 [shape = 's32[1]{0}', space=sflag, size = 0x4, scoped, tag = 'scoped memory for tpu_custom_call.1']
    #allocation7 [shape = 'u8[32768]{0}', space=vmem, size = 0x8000, scoped, tag = 'input window, operand 3, single buffered']
    #allocation8 [shape = 'u8[4096]{0}', space=vmem, size = 0x1000, scoped, tag = 'output window, operand 0, single buffered']
    #allocation9 [shape = 'u8[512]{0}', space=vmem, size = 0x400, scoped, tag = 'output window, operand 1, single buffered']
    #allocation10 [shape = 's32[1]{0}', space=sflag, size = 0x4, scoped, tag = 'scoped memory for tpu_custom_call.1']
    %14 = vsyncpa [#allocation3], 0
    %15 = vsyncpa [#allocation6], 0
    %16 = vsyncpa [#allocation4], 0
    %17 = vsyncpa [#allocation10], 0
    // Predicated region
    $region2: #{tpu_custom_call.1} parent=1 // pred_check
      _
    $region3: #{tpu_custom_call.1} parent=1 // pred_check_branch
      %19 = sbr.rel (0) target = $region5
    $region4: #{tpu_custom_call.1} parent=1 // pred_region
      %s21 = ssub.s32 4608, 4608
      %22 = vsyncadd [#allocation3], %s21
      %s23 = sshll.u32 [#allocation2], 4
      %s24 = int_to_ptr.vmem [resolvable:$true] %s23
      %29 = dma.hbm_to_vmem [thread:$0]  %s0, 4608, %s24, [#allocation3], 1536, 1536, 96
    $region5: #{tpu_custom_call.1} parent=1 // pred_fallthru
      _
    // Predicated region
    $region6: #{tpu_custom_call.1} parent=1 // pred_check
      _
    $region7: #{tpu_custom_call.1} parent=1 // pred_check_branch
      %31 = sbr.rel (0) target = $region9
    $region8: #{tpu_custom_call.1} parent=1 // pred_region
      %s33 = ssub.s32 24576, 24576
      %34 = vsyncadd [#allocation6], %s33
      %s35 = sshll.u32 [#allocation5], 4
      %s36 = int_to_ptr.vmem [resolvable:$true] %s35
      %41 = dma.hbm_to_vmem [thread:$0]  %s1, 24576, %s36, [#allocation6], 64, 64, 4
    $region9: #{tpu_custom_call.1} parent=1 // pred_fallthru
      _
    // Predicated region
    $region10: #{tpu_custom_call.1} parent=1 // pred_check
      _
    $region11: #{tpu_custom_call.1} parent=1 // pred_check_branch
      %43 = sbr.rel (0) target = $region13
    $region12: #{tpu_custom_call.1} parent=1 // pred_region
      _
    $region13: #{tpu_custom_call.1} parent=1 // pred_fallthru
      _
    // Predicated region
    $region14: #{tpu_custom_call.1} parent=1 // pred_check
      _
    $region15: #{tpu_custom_call.1} parent=1 // pred_check_branch
      %45 = sbr.rel (0) target = $region17
    $region16: #{tpu_custom_call.1} parent=1 // pred_region
      %s47 = ssub.s32 1024, 1024
      %48 = vsyncadd [#allocation6], %s47
      %s49 = sshll.u32 [#allocation7], 4
      %s50 = int_to_ptr.vmem [resolvable:$true] %s49
      %55 = dma.hbm_to_vmem [thread:$0]  %s3, 1024, %s50, [#allocation6], 64, 64, 4
    $region17: #{tpu_custom_call.1} parent=1 // pred_fallthru
      _
    // Predicated region
    $region18: #{tpu_custom_call.1} parent=1 // pred_check
      _
    $region19: #{tpu_custom_call.1} parent=1 // pred_check_branch
      %57 = sbr.rel (0) target = $region21
    $region20: #{tpu_custom_call.1} parent=1 // pred_region
      _
    $region21: #{tpu_custom_call.1} parent=1 // pred_fallthru
      _
    // Predicated region
    $region22: #{tpu_custom_call.1} parent=1 // pred_check
      _
    $region23: #{tpu_custom_call.1} parent=1 // pred_check_branch
      %59 = sbr.rel (0) target = $region25
    $region24: #{tpu_custom_call.1} parent=1 // pred_region
      _
    $region25: #{tpu_custom_call.1} parent=1 // pred_fallthru
      _
    // Predicated region
    $region26: #{tpu_custom_call.1} parent=1 // pred_check
      _
    $region27: #{tpu_custom_call.1} parent=1 // pred_check_branch
      %61 = sbr.rel (0) target = $region29
    $region28: #{tpu_custom_call.1} parent=1 // pred_region
      _
    $region29: #{tpu_custom_call.1} parent=1 // pred_fallthru
      _
    // Predicated region
    $region30: #{tpu_custom_call.1} parent=1 // pred_check
      _
    $region31: #{tpu_custom_call.1} parent=1 // pred_check_branch
      %63 = sbr.rel (0) target = $region33
    $region32: #{tpu_custom_call.1} parent=1 // pred_region
      %64 = dma.done [#allocation3], 4608
    $region33: #{tpu_custom_call.1} parent=1 // pred_fallthru
      _
    // Predicated region
    $region34: #{tpu_custom_call.1} parent=1 // pred_check
      _
    $region35: #{tpu_custom_call.1} parent=1 // pred_check_branch
      %66 = sbr.rel (0) target = $region37
    $region36: #{tpu_custom_call.1} parent=1 // pred_region
      %67 = dma.done [#allocation6], 24576
    $region37: #{tpu_custom_call.1} parent=1 // pred_fallthru
      _
    // Predicated region
    $region38: #{tpu_custom_call.1} parent=1 // pred_check
      _
    $region39: #{tpu_custom_call.1} parent=1 // pred_check_branch
      %69 = sbr.rel (0) target = $region41
    $region40: #{tpu_custom_call.1} parent=1 // pred_region
      %70 = dma.done [#allocation6], 1024
    $region41: #{tpu_custom_call.1} parent=1 // pred_fallthru
      _
    %v72 = vld [vmem:[#allocation2] sm:$0xff]
    %v73 = vld [vmem:[#allocation2 + $0x8] sm:$0xff]
    %v74 = vld [vmem:[#allocation2 + $0x10] sm:$0xff]
    %v75 = vld [vmem:[#allocation2 + $0x18] sm:$0xff]
    %v76 = vld [vmem:[#allocation2 + $0x20] sm:$0xff]
    %v77 = vld [vmem:[#allocation2 + $0x28] sm:$0xff]
    %v78 = vld [vmem:[#allocation2 + $0x30] sm:$0xff]
    %v79 = vld [vmem:[#allocation2 + $0x38] sm:$0xff]
    %v80 = vld [vmem:[#allocation2 + $0x40] sm:$0xff]
    %v81 = vld [vmem:[#allocation2 + $0x48] sm:$0xff]
    %v82 = vld [vmem:[#allocation2 + $0x50] sm:$0xff]
    %v83 = vld [vmem:[#allocation2 + $0x58] sm:$0xff]
    %v84 = vld [vmem:[#allocation2 + $0x60] sm:$0xff]
    %v85 = vld [vmem:[#allocation2 + $0x68] sm:$0xff]
    %v86 = vld [vmem:[#allocation2 + $0x70] sm:$0xff]
    %v87 = vld [vmem:[#allocation2 + $0x78] sm:$0xff]
    %v88 = vld [vmem:[#allocation2 + $0x80] sm:$0xff]
    %v89 = vld [vmem:[#allocation2 + $0x88] sm:$0xff]
    %v90 = vld [vmem:[#allocation2 + $0x90] sm:$0xff]
    %v91 = vld [vmem:[#allocation2 + $0x98] sm:$0xff]
    %v92 = vld [vmem:[#allocation2 + $0xa0] sm:$0xff]
    %v93 = vld [vmem:[#allocation2 + $0xa8] sm:$0xff]
    %v94 = vld [vmem:[#allocation2 + $0xb0] sm:$0xff]
    %v95 = vld [vmem:[#allocation2 + $0xb8] sm:$0xff]
    %v96 = vld [vmem:[#allocation2 + $0xc0] sm:$0xff]
    %v97 = vld [vmem:[#allocation2 + $0xc8] sm:$0xff]
    %v98 = vld [vmem:[#allocation2 + $0xd0] sm:$0xff]
    %v99 = vld [vmem:[#allocation2 + $0xd8] sm:$0xff]
    %v100 = vld [vmem:[#allocation2 + $0xe0] sm:$0xff]
    %v101 = vld [vmem:[#allocation2 + $0xe8] sm:$0xff]
    %v102 = vld [vmem:[#allocation2 + $0xf0] sm:$0xff]
    %v103 = vld [vmem:[#allocation2 + $0xf8] sm:$0xff]
    %v104 = vld [vmem:[#allocation2 + $0x100] sm:$0xff]
    %v105 = vld [vmem:[#allocation2 + $0x108] sm:$0xff]
    %v106 = vld [vmem:[#allocation2 + $0x110] sm:$0xff]
    %v107 = vld [vmem:[#allocation2 + $0x118] sm:$0xff]
    %v108 = vld [vmem:[#allocation5] sm:$0xf]
    %v109 = vld [vmem:[#allocation5 + $0x4] sm:$0xf]
    %v110 = vld [vmem:[#allocation5 + $0x8] sm:$0xf]
    %v111 = vld [vmem:[#allocation5 + $0xc] sm:$0xf]
    %v112 = vld [vmem:[#allocation5 + $0x10] sm:$0xf]
    %v113 = vld [vmem:[#allocation5 + $0x14] sm:$0xf]
    %v114 = vld [vmem:[#allocation5 + $0x18] sm:$0xf]
    %v115 = vld [vmem:[#allocation5 + $0x1c] sm:$0xf]
    %v116 = vld [vmem:[#allocation5 + $0x20] sm:$0xf]
    %v117 = vld [vmem:[#allocation5 + $0x24] sm:$0xf]
    %v118 = vld [vmem:[#allocation5 + $0x28] sm:$0xf]
    %v119 = vld [vmem:[#allocation5 + $0x2c] sm:$0xf]
    %v120 = vld [vmem:[#allocation5 + $0x30] sm:$0xf]
    %v121 = vld [vmem:[#allocation5 + $0x34] sm:$0xf]
    %v122 = vld [vmem:[#allocation5 + $0x38] sm:$0xf]
    %v123 = vld [vmem:[#allocation5 + $0x3c] sm:$0xf]
    %v124 = vld [vmem:[#allocation5 + $0x40] sm:$0xf]
    %v125 = vld [vmem:[#allocation5 + $0x44] sm:$0xf]
    %v126 = vld [vmem:[#allocation5 + $0x48] sm:$0xf]
    %v127 = vld [vmem:[#allocation5 + $0x4c] sm:$0xf]
    %v128 = vld [vmem:[#allocation5 + $0x50] sm:$0xf]
    %v129 = vld [vmem:[#allocation5 + $0x54] sm:$0xf]
    %v130 = vld [vmem:[#allocation5 + $0x58] sm:$0xf]
    %v131 = vld [vmem:[#allocation5 + $0x5c] sm:$0xf]
    %v132 = vld [vmem:[#allocation5 + $0x60] sm:$0xf]
    %v133 = vld [vmem:[#allocation5 + $0x64] sm:$0xf]
    %v134 = vld [vmem:[#allocation5 + $0x68] sm:$0xf]
    %v135 = vld [vmem:[#allocation5 + $0x6c] sm:$0xf]
    %v136 = vld [vmem:[#allocation5 + $0x70] sm:$0xf]
    %v137 = vld [vmem:[#allocation5 + $0x74] sm:$0xf]
    %v138 = vld [vmem:[#allocation5 + $0x78] sm:$0xf]
    %v139 = vld [vmem:[#allocation5 + $0x7c] sm:$0xf]
    %v140 = vld [vmem:[#allocation5 + $0x80] sm:$0xf]
    %v141 = vld [vmem:[#allocation5 + $0x84] sm:$0xf]
    %v142 = vld [vmem:[#allocation5 + $0x88] sm:$0xf]
    %v143 = vld [vmem:[#allocation5 + $0x8c] sm:$0xf]
    %v144 = vld [vmem:[#allocation5 + $0x90] sm:$0xf]
    %v145 = vld [vmem:[#allocation5 + $0x94] sm:$0xf]
    %v146 = vld [vmem:[#allocation5 + $0x98] sm:$0xf]
    %v147 = vld [vmem:[#allocation5 + $0x9c] sm:$0xf]
    %v148 = vld [vmem:[#allocation5 + $0xa0] sm:$0xf]
    %v149 = vld [vmem:[#allocation5 + $0xa4] sm:$0xf]
    %v150 = vld [vmem:[#allocation5 + $0xa8] sm:$0xf]
    %v151 = vld [vmem:[#allocation5 + $0xac] sm:$0xf]
    %v152 = vld [vmem:[#allocation5 + $0xb0] sm:$0xf]
    %v153 = vld [vmem:[#allocation5 + $0xb4] sm:$0xf]
    %v154 = vld [vmem:[#allocation5 + $0xb8] sm:$0xf]
    %v155 = vld [vmem:[#allocation5 + $0xbc] sm:$0xf]
    %v156 = vld [vmem:[#allocation5 + $0xc0] sm:$0xf]
    %v157 = vld [vmem:[#allocation5 + $0xc4] sm:$0xf]
    %v158 = vld [vmem:[#allocation5 + $0xc8] sm:$0xf]
    %v159 = vld [vmem:[#allocation5 + $0xcc] sm:$0xf]
    %v160 = vld [vmem:[#allocation5 + $0xd0] sm:$0xf]
    %v161 = vld [vmem:[#allocation5 + $0xd4] sm:$0xf]
    %v162 = vld [vmem:[#allocation5 + $0xd8] sm:$0xf]
    %v163 = vld [vmem:[#allocation5 + $0xdc] sm:$0xf]
    %v164 = vld [vmem:[#allocation5 + $0xe0] sm:$0xf]
    %v165 = vld [vmem:[#allocation5 + $0xe4] sm:$0xf]
    %v166 = vld [vmem:[#allocation5 + $0xe8] sm:$0xf]
    %v167 = vld [vmem:[#allocation5 + $0xec] sm:$0xf]
    %v168 = vld [vmem:[#allocation5 + $0xf0] sm:$0xf]
    %v169 = vld [vmem:[#allocation5 + $0xf4] sm:$0xf]
    %v170 = vld [vmem:[#allocation5 + $0xf8] sm:$0xf]
    %v171 = vld [vmem:[#allocation5 + $0xfc] sm:$0xf]
    %v172 = vld [vmem:[#allocation5 + $0x100] sm:$0xf]
    %v173 = vld [vmem:[#allocation5 + $0x104] sm:$0xf]
    %v174 = vld [vmem:[#allocation5 + $0x108] sm:$0xf]
    %v175 = vld [vmem:[#allocation5 + $0x10c] sm:$0xf]
    %v176 = vld [vmem:[#allocation5 + $0x110] sm:$0xf]
    %v177 = vld [vmem:[#allocation5 + $0x114] sm:$0xf]
    %v178 = vld [vmem:[#allocation5 + $0x118] sm:$0xf]
    %v179 = vld [vmem:[#allocation5 + $0x11c] sm:$0xf]
    %v180 = vld [vmem:[#allocation5 + $0x120] sm:$0xf]
    %v181 = vld [vmem:[#allocation5 + $0x124] sm:$0xf]
    %v182 = vld [vmem:[#allocation5 + $0x128] sm:$0xf]
    %v183 = vld [vmem:[#allocation5 + $0x12c] sm:$0xf]
    %v184 = vld [vmem:[#allocation5 + $0x130] sm:$0xf]
    %v185 = vld [vmem:[#allocation5 + $0x134] sm:$0xf]
    %v186 = vld [vmem:[#allocation5 + $0x138] sm:$0xf]
    %v187 = vld [vmem:[#allocation5 + $0x13c] sm:$0xf]
    %v188 = vld [vmem:[#allocation5 + $0x140] sm:$0xf]
    %v189 = vld [vmem:[#allocation5 + $0x144] sm:$0xf]
    %v190 = vld [vmem:[#allocation5 + $0x148] sm:$0xf]
    %v191 = vld [vmem:[#allocation5 + $0x14c] sm:$0xf]
    %v192 = vld [vmem:[#allocation5 + $0x150] sm:$0xf]
    %v193 = vld [vmem:[#allocation5 + $0x154] sm:$0xf]
    %v194 = vld [vmem:[#allocation5 + $0x158] sm:$0xf]
    %v195 = vld [vmem:[#allocation5 + $0x15c] sm:$0xf]
    %v196 = vld [vmem:[#allocation5 + $0x160] sm:$0xf]
    %v197 = vld [vmem:[#allocation5 + $0x164] sm:$0xf]
    %v198 = vld [vmem:[#allocation5 + $0x168] sm:$0xf]
    %v199 = vld [vmem:[#allocation5 + $0x16c] sm:$0xf]
    %v200 = vld [vmem:[#allocation5 + $0x170] sm:$0xf]
    %v201 = vld [vmem:[#allocation5 + $0x174] sm:$0xf]
    %v202 = vld [vmem:[#allocation5 + $0x178] sm:$0xf]
    %v203 = vld [vmem:[#allocation5 + $0x17c] sm:$0xf]
    %v204 = vld [vmem:[#allocation5 + $0x180] sm:$0xf]
    %v205 = vld [vmem:[#allocation5 + $0x184] sm:$0xf]
    %v206 = vld [vmem:[#allocation5 + $0x188] sm:$0xf]
    %v207 = vld [vmem:[#allocation5 + $0x18c] sm:$0xf]
    %v208 = vld [vmem:[#allocation5 + $0x190] sm:$0xf]
    %v209 = vld [vmem:[#allocation5 + $0x194] sm:$0xf]
    %v210 = vld [vmem:[#allocation5 + $0x198] sm:$0xf]
    %v211 = vld [vmem:[#allocation5 + $0x19c] sm:$0xf]
    %v212 = vld [vmem:[#allocation5 + $0x1a0] sm:$0xf]
    %v213 = vld [vmem:[#allocation5 + $0x1a4] sm:$0xf]
    %v214 = vld [vmem:[#allocation5 + $0x1a8] sm:$0xf]
    %v215 = vld [vmem:[#allocation5 + $0x1ac] sm:$0xf]
    %v216 = vld [vmem:[#allocation5 + $0x1b0] sm:$0xf]
    %v217 = vld [vmem:[#allocation5 + $0x1b4] sm:$0xf]
    %v218 = vld [vmem:[#allocation5 + $0x1b8] sm:$0xf]
    %v219 = vld [vmem:[#allocation5 + $0x1bc] sm:$0xf]
    %v220 = vld [vmem:[#allocation5 + $0x1c0] sm:$0xf]
    %v221 = vld [vmem:[#allocation5 + $0x1c4] sm:$0xf]
    %v222 = vld [vmem:[#allocation5 + $0x1c8] sm:$0xf]
    %v223 = vld [vmem:[#allocation5 + $0x1cc] sm:$0xf]
    %v224 = vld [vmem:[#allocation5 + $0x1d0] sm:$0xf]
    %v225 = vld [vmem:[#allocation5 + $0x1d4] sm:$0xf]
    %v226 = vld [vmem:[#allocation5 + $0x1d8] sm:$0xf]
    %v227 = vld [vmem:[#allocation5 + $0x1dc] sm:$0xf]
    %v228 = vld [vmem:[#allocation5 + $0x1e0] sm:$0xf]
    %v229 = vld [vmem:[#allocation5 + $0x1e4] sm:$0xf]
    %v230 = vld [vmem:[#allocation5 + $0x1e8] sm:$0xf]
    %v231 = vld [vmem:[#allocation5 + $0x1ec] sm:$0xf]
    %v232 = vld [vmem:[#allocation5 + $0x1f0] sm:$0xf]
    %v233 = vld [vmem:[#allocation5 + $0x1f4] sm:$0xf]
    %v234 = vld [vmem:[#allocation5 + $0x1f8] sm:$0xf]
    %v235 = vld [vmem:[#allocation5 + $0x1fc] sm:$0xf]
    %v236 = vld [vmem:[#allocation5 + $0x200] sm:$0xf]
    %v237 = vld [vmem:[#allocation5 + $0x204] sm:$0xf]
    %v238 = vld [vmem:[#allocation5 + $0x208] sm:$0xf]
    %v239 = vld [vmem:[#allocation5 + $0x20c] sm:$0xf]
    %v240 = vld [vmem:[#allocation5 + $0x210] sm:$0xf]
    %v241 = vld [vmem:[#allocation5 + $0x214] sm:$0xf]
    %v242 = vld [vmem:[#allocation5 + $0x218] sm:$0xf]
    %v243 = vld [vmem:[#allocation5 + $0x21c] sm:$0xf]
    %v244 = vld [vmem:[#allocation5 + $0x220] sm:$0xf]
    %v245 = vld [vmem:[#allocation5 + $0x224] sm:$0xf]
    %v246 = vld [vmem:[#allocation5 + $0x228] sm:$0xf]
    %v247 = vld [vmem:[#allocation5 + $0x22c] sm:$0xf]
    %v248 = vld [vmem:[#allocation5 + $0x230] sm:$0xf]
    %v249 = vld [vmem:[#allocation5 + $0x234] sm:$0xf]
    %v250 = vld [vmem:[#allocation5 + $0x238] sm:$0xf]
    %v251 = vld [vmem:[#allocation5 + $0x23c] sm:$0xf]
    %v252 = vld [vmem:[#allocation5 + $0x240] sm:$0xf]
    %v253 = vld [vmem:[#allocation5 + $0x244] sm:$0xf]
    %v254 = vld [vmem:[#allocation5 + $0x248] sm:$0xf]
    %v255 = vld [vmem:[#allocation5 + $0x24c] sm:$0xf]
    %v256 = vld [vmem:[#allocation5 + $0x250] sm:$0xf]
    %v257 = vld [vmem:[#allocation5 + $0x254] sm:$0xf]
    %v258 = vld [vmem:[#allocation5 + $0x258] sm:$0xf]
    %v259 = vld [vmem:[#allocation5 + $0x25c] sm:$0xf]
    %v260 = vld [vmem:[#allocation5 + $0x260] sm:$0xf]
    %v261 = vld [vmem:[#allocation5 + $0x264] sm:$0xf]
    %v262 = vld [vmem:[#allocation5 + $0x268] sm:$0xf]
    %v263 = vld [vmem:[#allocation5 + $0x26c] sm:$0xf]
    %v264 = vld [vmem:[#allocation5 + $0x270] sm:$0xf]
    %v265 = vld [vmem:[#allocation5 + $0x274] sm:$0xf]
    %v266 = vld [vmem:[#allocation5 + $0x278] sm:$0xf]
    %v267 = vld [vmem:[#allocation5 + $0x27c] sm:$0xf]
    %v268 = vld [vmem:[#allocation5 + $0x280] sm:$0xf]
    %v269 = vld [vmem:[#allocation5 + $0x284] sm:$0xf]
    %v270 = vld [vmem:[#allocation5 + $0x288] sm:$0xf]
    %v271 = vld [vmem:[#allocation5 + $0x28c] sm:$0xf]
    %v272 = vld [vmem:[#allocation5 + $0x290] sm:$0xf]
    %v273 = vld [vmem:[#allocation5 + $0x294] sm:$0xf]
    %v274 = vld [vmem:[#allocation5 + $0x298] sm:$0xf]
    %v275 = vld [vmem:[#allocation5 + $0x29c] sm:$0xf]
    %v276 = vld [vmem:[#allocation5 + $0x2a0] sm:$0xf]
    %v277 = vld [vmem:[#allocation5 + $0x2a4] sm:$0xf]
    %v278 = vld [vmem:[#allocation5 + $0x2a8] sm:$0xf]
    %v279 = vld [vmem:[#allocation5 + $0x2ac] sm:$0xf]
    %v280 = vld [vmem:[#allocation5 + $0x2b0] sm:$0xf]
    %v281 = vld [vmem:[#allocation5 + $0x2b4] sm:$0xf]
    %v282 = vld [vmem:[#allocation5 + $0x2b8] sm:$0xf]
    %v283 = vld [vmem:[#allocation5 + $0x2bc] sm:$0xf]
    %v284 = vld [vmem:[#allocation5 + $0x2c0] sm:$0xf]
    %v285 = vld [vmem:[#allocation5 + $0x2c4] sm:$0xf]
    %v286 = vld [vmem:[#allocation5 + $0x2c8] sm:$0xf]
    %v287 = vld [vmem:[#allocation5 + $0x2cc] sm:$0xf]
    %v288 = vld [vmem:[#allocation5 + $0x2d0] sm:$0xf]
    %v289 = vld [vmem:[#allocation5 + $0x2d4] sm:$0xf]
    %v290 = vld [vmem:[#allocation5 + $0x2d8] sm:$0xf]
    %v291 = vld [vmem:[#allocation5 + $0x2dc] sm:$0xf]
    %v292 = vld [vmem:[#allocation5 + $0x2e0] sm:$0xf]
    %v293 = vld [vmem:[#allocation5 + $0x2e4] sm:$0xf]
    %v294 = vld [vmem:[#allocation5 + $0x2e8] sm:$0xf]
    %v295 = vld [vmem:[#allocation5 + $0x2ec] sm:$0xf]
    %v296 = vld [vmem:[#allocation5 + $0x2f0] sm:$0xf]
    %v297 = vld [vmem:[#allocation5 + $0x2f4] sm:$0xf]
    %v298 = vld [vmem:[#allocation5 + $0x2f8] sm:$0xf]
    %v299 = vld [vmem:[#allocation5 + $0x2fc] sm:$0xf]
    %v300 = vld [vmem:[#allocation5 + $0x300] sm:$0xf]
    %v301 = vld [vmem:[#allocation5 + $0x304] sm:$0xf]
    %v302 = vld [vmem:[#allocation5 + $0x308] sm:$0xf]
    %v303 = vld [vmem:[#allocation5 + $0x30c] sm:$0xf]
    %v304 = vld [vmem:[#allocation5 + $0x310] sm:$0xf]
    %v305 = vld [vmem:[#allocation5 + $0x314] sm:$0xf]
    %v306 = vld [vmem:[#allocation5 + $0x318] sm:$0xf]
    %v307 = vld [vmem:[#allocation5 + $0x31c] sm:$0xf]
    %v308 = vld [vmem:[#allocation5 + $0x320] sm:$0xf]
    %v309 = vld [vmem:[#allocation5 + $0x324] sm:$0xf]
    %v310 = vld [vmem:[#allocation5 + $0x328] sm:$0xf]
    %v311 = vld [vmem:[#allocation5 + $0x32c] sm:$0xf]
    %v312 = vld [vmem:[#allocation5 + $0x330] sm:$0xf]
    %v313 = vld [vmem:[#allocation5 + $0x334] sm:$0xf]
    %v314 = vld [vmem:[#allocation5 + $0x338] sm:$0xf]
    %v315 = vld [vmem:[#allocation5 + $0x33c] sm:$0xf]
    %v316 = vld [vmem:[#allocation5 + $0x340] sm:$0xf]
    %v317 = vld [vmem:[#allocation5 + $0x344] sm:$0xf]
    %v318 = vld [vmem:[#allocation5 + $0x348] sm:$0xf]
    %v319 = vld [vmem:[#allocation5 + $0x34c] sm:$0xf]
    %v320 = vld [vmem:[#allocation5 + $0x350] sm:$0xf]
    %v321 = vld [vmem:[#allocation5 + $0x354] sm:$0xf]
    %v322 = vld [vmem:[#allocation5 + $0x358] sm:$0xf]
    %v323 = vld [vmem:[#allocation5 + $0x35c] sm:$0xf]
    %v324 = vld [vmem:[#allocation5 + $0x360] sm:$0xf]
    %v325 = vld [vmem:[#allocation5 + $0x364] sm:$0xf]
    %v326 = vld [vmem:[#allocation5 + $0x368] sm:$0xf]
    %v327 = vld [vmem:[#allocation5 + $0x36c] sm:$0xf]
    %v328 = vld [vmem:[#allocation5 + $0x370] sm:$0xf]
    %v329 = vld [vmem:[#allocation5 + $0x374] sm:$0xf]
    %v330 = vld [vmem:[#allocation5 + $0x378] sm:$0xf]
    %v331 = vld [vmem:[#allocation5 + $0x37c] sm:$0xf]
    %v332 = vld [vmem:[#allocation5 + $0x380] sm:$0xf]
    %v333 = vld [vmem:[#allocation5 + $0x384] sm:$0xf]
    %v334 = vld [vmem:[#allocation5 + $0x388] sm:$0xf]
    %v335 = vld [vmem:[#allocation5 + $0x38c] sm:$0xf]
    %v336 = vld [vmem:[#allocation5 + $0x390] sm:$0xf]
    %v337 = vld [vmem:[#allocation5 + $0x394] sm:$0xf]
    %v338 = vld [vmem:[#allocation5 + $0x398] sm:$0xf]
    %v339 = vld [vmem:[#allocation5 + $0x39c] sm:$0xf]
    %v340 = vld [vmem:[#allocation5 + $0x3a0] sm:$0xf]
    %v341 = vld [vmem:[#allocation5 + $0x3a4] sm:$0xf]
    %v342 = vld [vmem:[#allocation5 + $0x3a8] sm:$0xf]
    %v343 = vld [vmem:[#allocation5 + $0x3ac] sm:$0xf]
    %v344 = vld [vmem:[#allocation5 + $0x3b0] sm:$0xf]
    %v345 = vld [vmem:[#allocation5 + $0x3b4] sm:$0xf]
    %v346 = vld [vmem:[#allocation5 + $0x3b8] sm:$0xf]
    %v347 = vld [vmem:[#allocation5 + $0x3bc] sm:$0xf]
    %v348 = vld [vmem:[#allocation5 + $0x3c0] sm:$0xf]
    %v349 = vld [vmem:[#allocation5 + $0x3c4] sm:$0xf]
    %v350 = vld [vmem:[#allocation5 + $0x3c8] sm:$0xf]
    %v351 = vld [vmem:[#allocation5 + $0x3cc] sm:$0xf]
    %v352 = vld [vmem:[#allocation5 + $0x3d0] sm:$0xf]
    %v353 = vld [vmem:[#allocation5 + $0x3d4] sm:$0xf]
    %v354 = vld [vmem:[#allocation5 + $0x3d8] sm:$0xf]
    %v355 = vld [vmem:[#allocation5 + $0x3dc] sm:$0xf]
    %v356 = vld [vmem:[#allocation5 + $0x3e0] sm:$0xf]
    %v357 = vld [vmem:[#allocation5 + $0x3e4] sm:$0xf]
    %v358 = vld [vmem:[#allocation5 + $0x3e8] sm:$0xf]
    %v359 = vld [vmem:[#allocation5 + $0x3ec] sm:$0xf]
    %v360 = vld [vmem:[#allocation5 + $0x3f0] sm:$0xf]
    %v361 = vld [vmem:[#allocation5 + $0x3f4] sm:$0xf]
    %v362 = vld [vmem:[#allocation5 + $0x3f8] sm:$0xf]
    %v363 = vld [vmem:[#allocation5 + $0x3fc] sm:$0xf]
    %v364 = vld [vmem:[#allocation5 + $0x400] sm:$0xf]
    %v365 = vld [vmem:[#allocation5 + $0x404] sm:$0xf]
    %v366 = vld [vmem:[#allocation5 + $0x408] sm:$0xf]
    %v367 = vld [vmem:[#allocation5 + $0x40c] sm:$0xf]
    %v368 = vld [vmem:[#allocation5 + $0x410] sm:$0xf]
    %v369 = vld [vmem:[#allocation5 + $0x414] sm:$0xf]
    %v370 = vld [vmem:[#allocation5 + $0x418] sm:$0xf]
    %v371 = vld [vmem:[#allocation5 + $0x41c] sm:$0xf]
    %v372 = vld [vmem:[#allocation5 + $0x420] sm:$0xf]
    %v373 = vld [vmem:[#allocation5 + $0x424] sm:$0xf]
    %v374 = vld [vmem:[#allocation5 + $0x428] sm:$0xf]
    %v375 = vld [vmem:[#allocation5 + $0x42c] sm:$0xf]
    %v376 = vld [vmem:[#allocation5 + $0x430] sm:$0xf]
    %v377 = vld [vmem:[#allocation5 + $0x434] sm:$0xf]
    %v378 = vld [vmem:[#allocation5 + $0x438] sm:$0xf]
    %v379 = vld [vmem:[#allocation5 + $0x43c] sm:$0xf]
    %v380 = vld [vmem:[#allocation5 + $0x440] sm:$0xf]
    %v381 = vld [vmem:[#allocation5 + $0x444] sm:$0xf]
    %v382 = vld [vmem:[#allocation5 + $0x448] sm:$0xf]
    %v383 = vld [vmem:[#allocation5 + $0x44c] sm:$0xf]
    %v384 = vld [vmem:[#allocation5 + $0x450] sm:$0xf]
    %v385 = vld [vmem:[#allocation5 + $0x454] sm:$0xf]
    %v386 = vld [vmem:[#allocation5 + $0x458] sm:$0xf]
    %v387 = vld [vmem:[#allocation5 + $0x45c] sm:$0xf]
    %v388 = vld [vmem:[#allocation5 + $0x460] sm:$0xf]
    %v389 = vld [vmem:[#allocation5 + $0x464] sm:$0xf]
    %v390 = vld [vmem:[#allocation5 + $0x468] sm:$0xf]
    %v391 = vld [vmem:[#allocation5 + $0x46c] sm:$0xf]
    %v392 = vld [vmem:[#allocation5 + $0x470] sm:$0xf]
    %v393 = vld [vmem:[#allocation5 + $0x474] sm:$0xf]
    %v394 = vld [vmem:[#allocation5 + $0x478] sm:$0xf]
    %v395 = vld [vmem:[#allocation5 + $0x47c] sm:$0xf]
    %v396 = vld [vmem:[#allocation5 + $0x480] sm:$0xf]
    %v397 = vld [vmem:[#allocation5 + $0x484] sm:$0xf]
    %v398 = vld [vmem:[#allocation5 + $0x488] sm:$0xf]
    %v399 = vld [vmem:[#allocation5 + $0x48c] sm:$0xf]
    %v400 = vld [vmem:[#allocation5 + $0x490] sm:$0xf]
    %v401 = vld [vmem:[#allocation5 + $0x494] sm:$0xf]
    %v402 = vld [vmem:[#allocation5 + $0x498] sm:$0xf]
    %v403 = vld [vmem:[#allocation5 + $0x49c] sm:$0xf]
    %v404 = vld [vmem:[#allocation5 + $0x4a0] sm:$0xf]
    %v405 = vld [vmem:[#allocation5 + $0x4a4] sm:$0xf]
    %v406 = vld [vmem:[#allocation5 + $0x4a8] sm:$0xf]
    %v407 = vld [vmem:[#allocation5 + $0x4ac] sm:$0xf]
    %v408 = vld [vmem:[#allocation5 + $0x4b0] sm:$0xf]
    %v409 = vld [vmem:[#allocation5 + $0x4b4] sm:$0xf]
    %v410 = vld [vmem:[#allocation5 + $0x4b8] sm:$0xf]
    %v411 = vld [vmem:[#allocation5 + $0x4bc] sm:$0xf]
    %v412 = vld [vmem:[#allocation5 + $0x4c0] sm:$0xf]
    %v413 = vld [vmem:[#allocation5 + $0x4c4] sm:$0xf]
    %v414 = vld [vmem:[#allocation5 + $0x4c8] sm:$0xf]
    %v415 = vld [vmem:[#allocation5 + $0x4cc] sm:$0xf]
    %v416 = vld [vmem:[#allocation5 + $0x4d0] sm:$0xf]
    %v417 = vld [vmem:[#allocation5 + $0x4d4] sm:$0xf]
    %v418 = vld [vmem:[#allocation5 + $0x4d8] sm:$0xf]
    %v419 = vld [vmem:[#allocation5 + $0x4dc] sm:$0xf]
    %v420 = vld [vmem:[#allocation5 + $0x4e0] sm:$0xf]
    %v421 = vld [vmem:[#allocation5 + $0x4e4] sm:$0xf]
    %v422 = vld [vmem:[#allocation5 + $0x4e8] sm:$0xf]
    %v423 = vld [vmem:[#allocation5 + $0x4ec] sm:$0xf]
    %v424 = vld [vmem:[#allocation5 + $0x4f0] sm:$0xf]
    %v425 = vld [vmem:[#allocation5 + $0x4f4] sm:$0xf]
    %v426 = vld [vmem:[#allocation5 + $0x4f8] sm:$0xf]
    %v427 = vld [vmem:[#allocation5 + $0x4fc] sm:$0xf]
    %v428 = vld [vmem:[#allocation5 + $0x500] sm:$0xf]
    %v429 = vld [vmem:[#allocation5 + $0x504] sm:$0xf]
    %v430 = vld [vmem:[#allocation5 + $0x508] sm:$0xf]
    %v431 = vld [vmem:[#allocation5 + $0x50c] sm:$0xf]
    %v432 = vld [vmem:[#allocation5 + $0x510] sm:$0xf]
    %v433 = vld [vmem:[#allocation5 + $0x514] sm:$0xf]
    %v434 = vld [vmem:[#allocation5 + $0x518] sm:$0xf]
    %v435 = vld [vmem:[#allocation5 + $0x51c] sm:$0xf]
    %v436 = vld [vmem:[#allocation5 + $0x520] sm:$0xf]
    %v437 = vld [vmem:[#allocation5 + $0x524] sm:$0xf]
    %v438 = vld [vmem:[#allocation5 + $0x528] sm:$0xf]
    %v439 = vld [vmem:[#allocation5 + $0x52c] sm:$0xf]
    %v440 = vld [vmem:[#allocation5 + $0x530] sm:$0xf]
    %v441 = vld [vmem:[#allocation5 + $0x534] sm:$0xf]
    %v442 = vld [vmem:[#allocation5 + $0x538] sm:$0xf]
    %v443 = vld [vmem:[#allocation5 + $0x53c] sm:$0xf]
    %v444 = vld [vmem:[#allocation5 + $0x540] sm:$0xf]
    %v445 = vld [vmem:[#allocation5 + $0x544] sm:$0xf]
    %v446 = vld [vmem:[#allocation5 + $0x548] sm:$0xf]
    %v447 = vld [vmem:[#allocation5 + $0x54c] sm:$0xf]
    %v448 = vld [vmem:[#allocation5 + $0x550] sm:$0xf]
    %v449 = vld [vmem:[#allocation5 + $0x554] sm:$0xf]
    %v450 = vld [vmem:[#allocation5 + $0x558] sm:$0xf]
    %v451 = vld [vmem:[#allocation5 + $0x55c] sm:$0xf]
    %v452 = vld [vmem:[#allocation5 + $0x560] sm:$0xf]
    %v453 = vld [vmem:[#allocation5 + $0x564] sm:$0xf]
    %v454 = vld [vmem:[#allocation5 + $0x568] sm:$0xf]
    %v455 = vld [vmem:[#allocation5 + $0x56c] sm:$0xf]
    %v456 = vld [vmem:[#allocation5 + $0x570] sm:$0xf]
    %v457 = vld [vmem:[#allocation5 + $0x574] sm:$0xf]
    %v458 = vld [vmem:[#allocation5 + $0x578] sm:$0xf]
    %v459 = vld [vmem:[#allocation5 + $0x57c] sm:$0xf]
    %v460 = vld [vmem:[#allocation5 + $0x580] sm:$0xf]
    %v461 = vld [vmem:[#allocation5 + $0x584] sm:$0xf]
    %v462 = vld [vmem:[#allocation5 + $0x588] sm:$0xf]
    %v463 = vld [vmem:[#allocation5 + $0x58c] sm:$0xf]
    %v464 = vld [vmem:[#allocation5 + $0x590] sm:$0xf]
    %v465 = vld [vmem:[#allocation5 + $0x594] sm:$0xf]
    %v466 = vld [vmem:[#allocation5 + $0x598] sm:$0xf]
    %v467 = vld [vmem:[#allocation5 + $0x59c] sm:$0xf]
    %v468 = vld [vmem:[#allocation5 + $0x5a0] sm:$0xf]
    %v469 = vld [vmem:[#allocation5 + $0x5a4] sm:$0xf]
    %v470 = vld [vmem:[#allocation5 + $0x5a8] sm:$0xf]
    %v471 = vld [vmem:[#allocation5 + $0x5ac] sm:$0xf]
    %v472 = vld [vmem:[#allocation5 + $0x5b0] sm:$0xf]
    %v473 = vld [vmem:[#allocation5 + $0x5b4] sm:$0xf]
    %v474 = vld [vmem:[#allocation5 + $0x5b8] sm:$0xf]
    %v475 = vld [vmem:[#allocation5 + $0x5bc] sm:$0xf]
    %v476 = vld [vmem:[#allocation5 + $0x5c0] sm:$0xf]
    %v477 = vld [vmem:[#allocation5 + $0x5c4] sm:$0xf]
    %v478 = vld [vmem:[#allocation5 + $0x5c8] sm:$0xf]
    %v479 = vld [vmem:[#allocation5 + $0x5cc] sm:$0xf]
    %v480 = vld [vmem:[#allocation5 + $0x5d0] sm:$0xf]
    %v481 = vld [vmem:[#allocation5 + $0x5d4] sm:$0xf]
    %v482 = vld [vmem:[#allocation5 + $0x5d8] sm:$0xf]
    %v483 = vld [vmem:[#allocation5 + $0x5dc] sm:$0xf]
    %v484 = vld [vmem:[#allocation5 + $0x5e0] sm:$0xf]
    %v485 = vld [vmem:[#allocation5 + $0x5e4] sm:$0xf]
    %v486 = vld [vmem:[#allocation5 + $0x5e8] sm:$0xf]
    %v487 = vld [vmem:[#allocation5 + $0x5ec] sm:$0xf]
    %v488 = vld [vmem:[#allocation5 + $0x5f0] sm:$0xf]
    %v489 = vld [vmem:[#allocation5 + $0x5f4] sm:$0xf]
    %v490 = vld [vmem:[#allocation5 + $0x5f8] sm:$0xf]
    %v491 = vld [vmem:[#allocation5 + $0x5fc] sm:$0xf]
    %v492 = vld [vmem:[%s2] sm:$0x1]
    %v494 = vlaneseq
    %v495 = vshrl.u32 %v494, 7
    %v496 = vsub.s32 0, %v495
    %v497 = vrot.slane %v492, %v496
    %v535 = vunpack.c.l.b16 %v72
    %v536 = vunpack.c.h.b16 %v72
    %v537 = vunpack.c.l.b16 %v73
    %v538 = vunpack.c.h.b16 %v73
    %v539 = vunpack.c.l.b16 %v74
    %v540 = vunpack.c.h.b16 %v74
    %v541 = vunpack.c.l.b16 %v75
    %v542 = vunpack.c.h.b16 %v75
    %v543 = vunpack.c.l.b16 %v76
    %v544 = vunpack.c.h.b16 %v76
    %v545 = vunpack.c.l.b16 %v77
    %v546 = vunpack.c.h.b16 %v77
    %v547 = vunpack.c.l.b16 %v78
    %v548 = vunpack.c.h.b16 %v78
    %v549 = vunpack.c.l.b16 %v79
    %v550 = vunpack.c.h.b16 %v79
    %v551 = vunpack.c.l.b16 %v80
    %v552 = vunpack.c.h.b16 %v80
    %v553 = vunpack.c.l.b16 %v81
    %v554 = vunpack.c.h.b16 %v81
    %v555 = vunpack.c.l.b16 %v82
    %v556 = vunpack.c.h.b16 %v82
    %v557 = vunpack.c.l.b16 %v83
    %v558 = vunpack.c.h.b16 %v83
    %v559 = vunpack.c.l.b16 %v84
    %v560 = vunpack.c.h.b16 %v84
    %v561 = vunpack.c.l.b16 %v85
    %v562 = vunpack.c.h.b16 %v85
    %v563 = vunpack.c.l.b16 %v86
    %v564 = vunpack.c.h.b16 %v86
    %v565 = vunpack.c.l.b16 %v87
    %v566 = vunpack.c.h.b16 %v87
    %v567 = vunpack.c.l.b16 %v88
    %v568 = vunpack.c.h.b16 %v88
    %v569 = vunpack.c.l.b16 %v89
    %v570 = vunpack.c.h.b16 %v89
    %v571 = vunpack.c.l.b16 %v90
    %v572 = vunpack.c.h.b16 %v90
    %v573 = vunpack.c.l.b16 %v91
    %v574 = vunpack.c.h.b16 %v91
    %v575 = vunpack.c.l.b16 %v92
    %v576 = vunpack.c.h.b16 %v92
    %v577 = vunpack.c.l.b16 %v93
    %v578 = vunpack.c.h.b16 %v93
    %v579 = vunpack.c.l.b16 %v94
    %v580 = vunpack.c.h.b16 %v94
    %v581 = vunpack.c.l.b16 %v95
    %v582 = vunpack.c.h.b16 %v95
    %v583 = vunpack.c.l.b16 %v96
    %v584 = vunpack.c.h.b16 %v96
    %v585 = vunpack.c.l.b16 %v97
    %v586 = vunpack.c.h.b16 %v97
    %v587 = vunpack.c.l.b16 %v98
    %v588 = vunpack.c.h.b16 %v98
    %v589 = vunpack.c.l.b16 %v99
    %v590 = vunpack.c.h.b16 %v99
    %v591 = vunpack.c.l.b16 %v100
    %v592 = vunpack.c.h.b16 %v100
    %v593 = vunpack.c.l.b16 %v101
    %v594 = vunpack.c.h.b16 %v101
    %v595 = vunpack.c.l.b16 %v102
    %v596 = vunpack.c.h.b16 %v102
    %v597 = vunpack.c.l.b16 %v103
    %v598 = vunpack.c.h.b16 %v103
    %v599 = vunpack.c.l.b16 %v104
    %v600 = vunpack.c.h.b16 %v104
    %v601 = vunpack.c.l.b16 %v105
    %v602 = vunpack.c.h.b16 %v105
    %v603 = vunpack.c.l.b16 %v106
    %v604 = vunpack.c.h.b16 %v106
    %v605 = vunpack.c.l.b16 %v107
    %v606 = vunpack.c.h.b16 %v107
    %v607 = vpack.c.b16 %v559, %v535
    %v608 = vpack.c.b16 %v560, %v536
    %v609 = vpack.c.b16 %v561, %v537
    %v610 = vpack.c.b16 %v562, %v538
    %v611 = vpack.c.b16 %v563, %v539
    %v612 = vpack.c.b16 %v564, %v540
    %v613 = vpack.c.b16 %v565, %v541
    %v614 = vpack.c.b16 %v566, %v542
    %v615 = vpack.c.b16 %v567, %v543
    %v616 = vpack.c.b16 %v568, %v544
    %v617 = vpack.c.b16 %v569, %v545
    %v618 = vpack.c.b16 %v570, %v546
    %v619 = vpack.c.b16 %v571, %v547
    %v620 = vpack.c.b16 %v572, %v548
    %v621 = vpack.c.b16 %v573, %v549
    %v622 = vpack.c.b16 %v574, %v550
    %v623 = vpack.c.b16 %v575, %v551
    %v624 = vpack.c.b16 %v576, %v552
    %v625 = vpack.c.b16 %v577, %v553
    %v626 = vpack.c.b16 %v578, %v554
    %v627 = vpack.c.b16 %v579, %v555
    %v628 = vpack.c.b16 %v580, %v556
    %v629 = vpack.c.b16 %v581, %v557
    %v630 = vpack.c.b16 %v582, %v558
    %v631 = vpack.c.b16 %v583, %v583
    %v632 = vpack.c.b16 %v584, %v584
    %v633 = vpack.c.b16 %v585, %v585
    %v634 = vpack.c.b16 %v586, %v586
    %v635 = vpack.c.b16 %v587, %v587
    %v636 = vpack.c.b16 %v588, %v588
    %v637 = vpack.c.b16 %v589, %v589
    %v638 = vpack.c.b16 %v590, %v590
    %v639 = vpack.c.b16 %v591, %v591
    %v640 = vpack.c.b16 %v592, %v592
    %v641 = vpack.c.b16 %v593, %v593
    %v642 = vpack.c.b16 %v594, %v594
    %v643 = vpack.c.b16 %v595, %v595
    %v644 = vpack.c.b16 %v596, %v596
    %v645 = vpack.c.b16 %v597, %v597
    %v646 = vpack.c.b16 %v598, %v598
    %v647 = vpack.c.b16 %v599, %v599
    %v648 = vpack.c.b16 %v600, %v600
    %v649 = vpack.c.b16 %v601, %v601
    %v650 = vpack.c.b16 %v602, %v602
    %v651 = vpack.c.b16 %v603, %v603
    %v652 = vpack.c.b16 %v604, %v604
    %v653 = vpack.c.b16 %v605, %v605
    %v654 = vpack.c.b16 %v606, %v606
    %v1087 = vunpack.c.l.b16 %v108
    %v1088 = vunpack.c.l.b16 %v109
    %v1089 = vunpack.c.l.b16 %v110
    %v1090 = vunpack.c.l.b16 %v111
    %v1091 = vunpack.c.l.b16 %v112
    %v1092 = vunpack.c.l.b16 %v113
    %v1093 = vunpack.c.l.b16 %v114
    %v1094 = vunpack.c.l.b16 %v115
    %v1095 = vunpack.c.l.b16 %v116
    %v1096 = vunpack.c.l.b16 %v117
    %v1097 = vunpack.c.l.b16 %v118
    %v1098 = vunpack.c.l.b16 %v119
    %v1099 = vunpack.c.l.b16 %v120
    %v1100 = vunpack.c.l.b16 %v121
    %v1101 = vunpack.c.l.b16 %v122
    %v1102 = vunpack.c.l.b16 %v123
    %v1103 = vunpack.c.l.b16 %v124
    %v1104 = vunpack.c.l.b16 %v125
    %v1105 = vunpack.c.l.b16 %v126
    %v1106 = vunpack.c.l.b16 %v127
    %v1107 = vunpack.c.l.b16 %v128
    %v1108 = vunpack.c.l.b16 %v129
    %v1109 = vunpack.c.l.b16 %v130
    %v1110 = vunpack.c.l.b16 %v131
    %v1111 = vunpack.c.l.b16 %v132
    %v1112 = vunpack.c.l.b16 %v133
    %v1113 = vunpack.c.l.b16 %v134
    %v1114 = vunpack.c.l.b16 %v135
    %v1115 = vunpack.c.l.b16 %v136
    %v1116 = vunpack.c.l.b16 %v137
    %v1117 = vunpack.c.l.b16 %v138
    %v1118 = vunpack.c.l.b16 %v139
    %v1119 = vunpack.c.l.b16 %v140
    %v1120 = vunpack.c.l.b16 %v141
    %v1121 = vunpack.c.l.b16 %v142
    %v1122 = vunpack.c.l.b16 %v143
    %v1123 = vunpack.c.l.b16 %v144
    %v1124 = vunpack.c.l.b16 %v145
    %v1125 = vunpack.c.l.b16 %v146
    %v1126 = vunpack.c.l.b16 %v147
    %v1127 = vunpack.c.l.b16 %v148
    %v1128 = vunpack.c.l.b16 %v149
    %v1129 = vunpack.c.l.b16 %v150
    %v1130 = vunpack.c.l.b16 %v151
    %v1131 = vunpack.c.l.b16 %v152
    %v1132 = vunpack.c.l.b16 %v153
    %v1133 = vunpack.c.l.b16 %v154
    %v1134 = vunpack.c.l.b16 %v155
    %v1135 = vunpack.c.l.b16 %v156
    %v1136 = vunpack.c.l.b16 %v157
    %v1137 = vunpack.c.l.b16 %v158
    %v1138 = vunpack.c.l.b16 %v159
    %v1139 = vunpack.c.l.b16 %v160
    %v1140 = vunpack.c.l.b16 %v161
    %v1141 = vunpack.c.l.b16 %v162
    %v1142 = vunpack.c.l.b16 %v163
    %v1143 = vunpack.c.l.b16 %v164
    %v1144 = vunpack.c.l.b16 %v165
    %v1145 = vunpack.c.l.b16 %v166
    %v1146 = vunpack.c.l.b16 %v167
    %v1147 = vunpack.c.l.b16 %v168
    %v1148 = vunpack.c.l.b16 %v169
    %v1149 = vunpack.c.l.b16 %v170
    %v1150 = vunpack.c.l.b16 %v171
    %v1151 = vunpack.c.l.b16 %v172
    %v1152 = vunpack.c.l.b16 %v173
    %v1153 = vunpack.c.l.b16 %v174
    %v1154 = vunpack.c.l.b16 %v175
    %v1155 = vunpack.c.l.b16 %v176
    %v1156 = vunpack.c.l.b16 %v177
    %v1157 = vunpack.c.l.b16 %v178
    %v1158 = vunpack.c.l.b16 %v179
    %v1159 = vunpack.c.l.b16 %v180
    %v1160 = vunpack.c.l.b16 %v181
    %v1161 = vunpack.c.l.b16 %v182
    %v1162 = vunpack.c.l.b16 %v183
    %v1163 = vunpack.c.l.b16 %v184
    %v1164 = vunpack.c.l.b16 %v185
    %v1165 = vunpack.c.l.b16 %v186
    %v1166 = vunpack.c.l.b16 %v187
    %v1167 = vunpack.c.l.b16 %v188
    %v1168 = vunpack.c.l.b16 %v189
    %v1169 = vunpack.c.l.b16 %v190
    %v1170 = vunpack.c.l.b16 %v191
    %v1171 = vunpack.c.l.b16 %v192
    %v1172 = vunpack.c.l.b16 %v193
    %v1173 = vunpack.c.l.b16 %v194
    %v1174 = vunpack.c.l.b16 %v195
    %v1175 = vunpack.c.l.b16 %v196
    %v1176 = vunpack.c.l.b16 %v197
    %v1177 = vunpack.c.l.b16 %v198
    %v1178 = vunpack.c.l.b16 %v199
    %v1179 = vunpack.c.l.b16 %v200
    %v1180 = vunpack.c.l.b16 %v201
    %v1181 = vunpack.c.l.b16 %v202
    %v1182 = vunpack.c.l.b16 %v203
    %v1183 = vunpack.c.l.b16 %v204
    %v1184 = vunpack.c.l.b16 %v205
    %v1185 = vunpack.c.l.b16 %v206
    %v1186 = vunpack.c.l.b16 %v207
    %v1187 = vunpack.c.l.b16 %v208
    %v1188 = vunpack.c.l.b16 %v209
    %v1189 = vunpack.c.l.b16 %v210
    %v1190 = vunpack.c.l.b16 %v211
    %v1191 = vunpack.c.l.b16 %v212
    %v1192 = vunpack.c.l.b16 %v213
    %v1193 = vunpack.c.l.b16 %v214
    %v1194 = vunpack.c.l.b16 %v215
    %v1195 = vunpack.c.l.b16 %v216
    %v1196 = vunpack.c.l.b16 %v217
    %v1197 = vunpack.c.l.b16 %v218
    %v1198 = vunpack.c.l.b16 %v219
    %v1199 = vunpack.c.l.b16 %v220
    %v1200 = vunpack.c.l.b16 %v221
    %v1201 = vunpack.c.l.b16 %v222
    %v1202 = vunpack.c.l.b16 %v223
    %v1203 = vunpack.c.l.b16 %v224
    %v1204 = vunpack.c.l.b16 %v225
    %v1205 = vunpack.c.l.b16 %v226
    %v1206 = vunpack.c.l.b16 %v227
    %v1207 = vunpack.c.l.b16 %v228
    %v1208 = vunpack.c.l.b16 %v229
    %v1209 = vunpack.c.l.b16 %v230
    %v1210 = vunpack.c.l.b16 %v231
    %v1211 = vunpack.c.l.b16 %v232
    %v1212 = vunpack.c.l.b16 %v233
    %v1213 = vunpack.c.l.b16 %v234
    %v1214 = vunpack.c.l.b16 %v235
    %v1215 = vunpack.c.l.b16 %v236
    %v1216 = vunpack.c.l.b16 %v237
    %v1217 = vunpack.c.l.b16 %v238
    %v1218 = vunpack.c.l.b16 %v239
    %v1219 = vunpack.c.l.b16 %v240
    %v1220 = vunpack.c.l.b16 %v241
    %v1221 = vunpack.c.l.b16 %v242
    %v1222 = vunpack.c.l.b16 %v243
    %v1223 = vunpack.c.l.b16 %v244
    %v1224 = vunpack.c.l.b16 %v245
    %v1225 = vunpack.c.l.b16 %v246
    %v1226 = vunpack.c.l.b16 %v247
    %v1227 = vunpack.c.l.b16 %v248
    %v1228 = vunpack.c.l.b16 %v249
    %v1229 = vunpack.c.l.b16 %v250
    %v1230 = vunpack.c.l.b16 %v251
    %v1231 = vunpack.c.l.b16 %v252
    %v1232 = vunpack.c.l.b16 %v253
    %v1233 = vunpack.c.l.b16 %v254
    %v1234 = vunpack.c.l.b16 %v255
    %v1235 = vunpack.c.l.b16 %v256
    %v1236 = vunpack.c.l.b16 %v257
    %v1237 = vunpack.c.l.b16 %v258
    %v1238 = vunpack.c.l.b16 %v259
    %v1239 = vunpack.c.l.b16 %v260
    %v1240 = vunpack.c.l.b16 %v261
    %v1241 = vunpack.c.l.b16 %v262
    %v1242 = vunpack.c.l.b16 %v263
    %v1243 = vunpack.c.l.b16 %v264
    %v1244 = vunpack.c.l.b16 %v265
    %v1245 = vunpack.c.l.b16 %v266
    %v1246 = vunpack.c.l.b16 %v267
    %v1247 = vunpack.c.l.b16 %v268
    %v1248 = vunpack.c.l.b16 %v269
    %v1249 = vunpack.c.l.b16 %v270
    %v1250 = vunpack.c.l.b16 %v271
    %v1251 = vunpack.c.l.b16 %v272
    %v1252 = vunpack.c.l.b16 %v273
    %v1253 = vunpack.c.l.b16 %v274
    %v1254 = vunpack.c.l.b16 %v275
    %v1255 = vunpack.c.l.b16 %v276
    %v1256 = vunpack.c.l.b16 %v277
    %v1257 = vunpack.c.l.b16 %v278
    %v1258 = vunpack.c.l.b16 %v279
    %v1259 = vunpack.c.l.b16 %v280
    %v1260 = vunpack.c.l.b16 %v281
    %v1261 = vunpack.c.l.b16 %v282
    %v1262 = vunpack.c.l.b16 %v283
    %v1263 = vunpack.c.l.b16 %v284
    %v1264 = vunpack.c.l.b16 %v285
    %v1265 = vunpack.c.l.b16 %v286
    %v1266 = vunpack.c.l.b16 %v287
    %v1267 = vunpack.c.l.b16 %v288
    %v1268 = vunpack.c.l.b16 %v289
    %v1269 = vunpack.c.l.b16 %v290
    %v1270 = vunpack.c.l.b16 %v291
    %v1271 = vunpack.c.l.b16 %v292
    %v1272 = vunpack.c.l.b16 %v293
    %v1273 = vunpack.c.l.b16 %v294
    %v1274 = vunpack.c.l.b16 %v295
    %v1275 = vunpack.c.l.b16 %v296
    %v1276 = vunpack.c.l.b16 %v297
    %v1277 = vunpack.c.l.b16 %v298
    %v1278 = vunpack.c.l.b16 %v299
    %v1279 = vunpack.c.l.b16 %v300
    %v1280 = vunpack.c.l.b16 %v301
    %v1281 = vunpack.c.l.b16 %v302
    %v1282 = vunpack.c.l.b16 %v303
    %v1283 = vunpack.c.l.b16 %v304
    %v1284 = vunpack.c.l.b16 %v305
    %v1285 = vunpack.c.l.b16 %v306
    %v1286 = vunpack.c.l.b16 %v307
    %v1287 = vunpack.c.l.b16 %v308
    %v1288 = vunpack.c.l.b16 %v309
    %v1289 = vunpack.c.l.b16 %v310
    %v1290 = vunpack.c.l.b16 %v311
    %v1291 = vunpack.c.l.b16 %v312
    %v1292 = vunpack.c.l.b16 %v313
    %v1293 = vunpack.c.l.b16 %v314
    %v1294 = vunpack.c.l.b16 %v315
    %v1295 = vunpack.c.l.b16 %v316
    %v1296 = vunpack.c.l.b16 %v317
    %v1297 = vunpack.c.l.b16 %v318
    %v1298 = vunpack.c.l.b16 %v319
    %v1299 = vunpack.c.l.b16 %v320
    %v1300 = vunpack.c.l.b16 %v321
    %v1301 = vunpack.c.l.b16 %v322
    %v1302 = vunpack.c.l.b16 %v323
    %v1303 = vunpack.c.l.b16 %v324
    %v1304 = vunpack.c.l.b16 %v325
    %v1305 = vunpack.c.l.b16 %v326
    %v1306 = vunpack.c.l.b16 %v327
    %v1307 = vunpack.c.l.b16 %v328
    %v1308 = vunpack.c.l.b16 %v329
    %v1309 = vunpack.c.l.b16 %v330
    %v1310 = vunpack.c.l.b16 %v331
    %v1311 = vunpack.c.l.b16 %v332
    %v1312 = vunpack.c.l.b16 %v333
    %v1313 = vunpack.c.l.b16 %v334
    %v1314 = vunpack.c.l.b16 %v335
    %v1315 = vunpack.c.l.b16 %v336
    %v1316 = vunpack.c.l.b16 %v337
    %v1317 = vunpack.c.l.b16 %v338
    %v1318 = vunpack.c.l.b16 %v339
    %v1319 = vunpack.c.l.b16 %v340
    %v1320 = vunpack.c.l.b16 %v341
    %v1321 = vunpack.c.l.b16 %v342
    %v1322 = vunpack.c.l.b16 %v343
    %v1323 = vunpack.c.l.b16 %v344
    %v1324 = vunpack.c.l.b16 %v345
    %v1325 = vunpack.c.l.b16 %v346
    %v1326 = vunpack.c.l.b16 %v347
    %v1327 = vunpack.c.l.b16 %v348
    %v1328 = vunpack.c.l.b16 %v349
    %v1329 = vunpack.c.l.b16 %v350
    %v1330 = vunpack.c.l.b16 %v351
    %v1331 = vunpack.c.l.b16 %v352
    %v1332 = vunpack.c.l.b16 %v353
    %v1333 = vunpack.c.l.b16 %v354
    %v1334 = vunpack.c.l.b16 %v355
    %v1335 = vunpack.c.l.b16 %v356
    %v1336 = vunpack.c.l.b16 %v357
    %v1337 = vunpack.c.l.b16 %v358
    %v1338 = vunpack.c.l.b16 %v359
    %v1339 = vunpack.c.l.b16 %v360
    %v1340 = vunpack.c.l.b16 %v361
    %v1341 = vunpack.c.l.b16 %v362
    %v1342 = vunpack.c.l.b16 %v363
    %v1343 = vunpack.c.l.b16 %v364
    %v1344 = vunpack.c.l.b16 %v365
    %v1345 = vunpack.c.l.b16 %v366
    %v1346 = vunpack.c.l.b16 %v367
    %v1347 = vunpack.c.l.b16 %v368
    %v1348 = vunpack.c.l.b16 %v369
    %v1349 = vunpack.c.l.b16 %v370
    %v1350 = vunpack.c.l.b16 %v371
    %v1351 = vunpack.c.l.b16 %v372
    %v1352 = vunpack.c.l.b16 %v373
    %v1353 = vunpack.c.l.b16 %v374
    %v1354 = vunpack.c.l.b16 %v375
    %v1355 = vunpack.c.l.b16 %v376
    %v1356 = vunpack.c.l.b16 %v377
    %v1357 = vunpack.c.l.b16 %v378
    %v1358 = vunpack.c.l.b16 %v379
    %v1359 = vunpack.c.l.b16 %v380
    %v1360 = vunpack.c.l.b16 %v381
    %v1361 = vunpack.c.l.b16 %v382
    %v1362 = vunpack.c.l.b16 %v383
    %v1363 = vunpack.c.l.b16 %v384
    %v1364 = vunpack.c.l.b16 %v385
    %v1365 = vunpack.c.l.b16 %v386
    %v1366 = vunpack.c.l.b16 %v387
    %v1367 = vunpack.c.l.b16 %v388
    %v1368 = vunpack.c.l.b16 %v389
    %v1369 = vunpack.c.l.b16 %v390
    %v1370 = vunpack.c.l.b16 %v391
    %v1371 = vunpack.c.l.b16 %v392
    %v1372 = vunpack.c.l.b16 %v393
    %v1373 = vunpack.c.l.b16 %v394
    %v1374 = vunpack.c.l.b16 %v395
    %v1375 = vunpack.c.l.b16 %v396
    %v1376 = vunpack.c.l.b16 %v397
    %v1377 = vunpack.c.l.b16 %v398
    %v1378 = vunpack.c.l.b16 %v399
    %v1379 = vunpack.c.l.b16 %v400
    %v1380 = vunpack.c.l.b16 %v401
    %v1381 = vunpack.c.l.b16 %v402
    %v1382 = vunpack.c.l.b16 %v403
    %v1383 = vunpack.c.l.b16 %v404
    %v1384 = vunpack.c.l.b16 %v405
    %v1385 = vunpack.c.l.b16 %v406
    %v1386 = vunpack.c.l.b16 %v407
    %v1387 = vunpack.c.l.b16 %v408
    %v1388 = vunpack.c.l.b16 %v409
    %v1389 = vunpack.c.l.b16 %v410
    %v1390 = vunpack.c.l.b16 %v411
    %v1391 = vunpack.c.l.b16 %v412
    %v1392 = vunpack.c.l.b16 %v413
    %v1393 = vunpack.c.l.b16 %v414
    %v1394 = vunpack.c.l.b16 %v415
    %v1395 = vunpack.c.l.b16 %v416
    %v1396 = vunpack.c.l.b16 %v417
    %v1397 = vunpack.c.l.b16 %v418
    %v1398 = vunpack.c.l.b16 %v419
    %v1399 = vunpack.c.l.b16 %v420
    %v1400 = vunpack.c.l.b16 %v421
    %v1401 = vunpack.c.l.b16 %v422
    %v1402 = vunpack.c.l.b16 %v423
    %v1403 = vunpack.c.l.b16 %v424
    %v1404 = vunpack.c.l.b16 %v425
    %v1405 = vunpack.c.l.b16 %v426
    %v1406 = vunpack.c.l.b16 %v427
    %v1407 = vunpack.c.l.b16 %v428
    %v1408 = vunpack.c.l.b16 %v429
    %v1409 = vunpack.c.l.b16 %v430
    %v1410 = vunpack.c.l.b16 %v431
    %v1411 = vunpack.c.l.b16 %v432
    %v1412 = vunpack.c.l.b16 %v433
    %v1413 = vunpack.c.l.b16 %v434
    %v1414 = vunpack.c.l.b16 %v435
    %v1415 = vunpack.c.l.b16 %v436
    %v1416 = vunpack.c.l.b16 %v437
    %v1417 = vunpack.c.l.b16 %v438
    %v1418 = vunpack.c.l.b16 %v439
    %v1419 = vunpack.c.l.b16 %v440
    %v1420 = vunpack.c.l.b16 %v441
    %v1421 = vunpack.c.l.b16 %v442
    %v1422 = vunpack.c.l.b16 %v443
    %v1423 = vunpack.c.l.b16 %v444
    %v1424 = vunpack.c.l.b16 %v445
    %v1425 = vunpack.c.l.b16 %v446
    %v1426 = vunpack.c.l.b16 %v447
    %v1427 = vunpack.c.l.b16 %v448
    %v1428 = vunpack.c.l.b16 %v449
    %v1429 = vunpack.c.l.b16 %v450
    %v1430 = vunpack.c.l.b16 %v451
    %v1431 = vunpack.c.l.b16 %v452
    %v1432 = vunpack.c.l.b16 %v453
    %v1433 = vunpack.c.l.b16 %v454
    %v1434 = vunpack.c.l.b16 %v455
    %v1435 = vunpack.c.l.b16 %v456
    %v1436 = vunpack.c.l.b16 %v457
    %v1437 = vunpack.c.l.b16 %v458
    %v1438 = vunpack.c.l.b16 %v459
    %v1439 = vunpack.c.l.b16 %v460
    %v1440 = vunpack.c.l.b16 %v461
    %v1441 = vunpack.c.l.b16 %v462
    %v1442 = vunpack.c.l.b16 %v463
    %v1443 = vunpack.c.l.b16 %v464
    %v1444 = vunpack.c.l.b16 %v465
    %v1445 = vunpack.c.l.b16 %v466
    %v1446 = vunpack.c.l.b16 %v467
    %v1447 = vunpack.c.l.b16 %v468
    %v1448 = vunpack.c.l.b16 %v469
    %v1449 = vunpack.c.l.b16 %v470
    %v1450 = vunpack.c.l.b16 %v471
    %v1451 = vunpack.c.l.b16 %v472
    %v1452 = vunpack.c.l.b16 %v473
    %v1453 = vunpack.c.l.b16 %v474
    %v1454 = vunpack.c.l.b16 %v475
    %v1455 = vunpack.c.l.b16 %v476
    %v1456 = vunpack.c.l.b16 %v477
    %v1457 = vunpack.c.l.b16 %v478
    %v1458 = vunpack.c.l.b16 %v479
    %v1459 = vunpack.c.l.b16 %v480
    %v1460 = vunpack.c.l.b16 %v481
    %v1461 = vunpack.c.l.b16 %v482
    %v1462 = vunpack.c.l.b16 %v483
    %v1463 = vunpack.c.l.b16 %v484
    %v1464 = vunpack.c.l.b16 %v485
    %v1465 = vunpack.c.l.b16 %v486
    %v1466 = vunpack.c.l.b16 %v487
    %v1467 = vunpack.c.l.b16 %v488
    %v1468 = vunpack.c.l.b16 %v489
    %v1469 = vunpack.c.l.b16 %v490
    %v1470 = vunpack.c.l.b16 %v491
    %v1471 = vpack.c.b16 %v1088, %v1087
    %v1472 = vpack.c.b16 %v1090, %v1089
    %v1473 = vpack.c.b16 %v1092, %v1091
    %v1474 = vpack.c.b16 %v1094, %v1093
    %v1475 = vpack.c.b16 %v1096, %v1095
    %v1476 = vpack.c.b16 %v1098, %v1097
    %v1477 = vpack.c.b16 %v1100, %v1099
    %v1478 = vpack.c.b16 %v1102, %v1101
    %v1479 = vpack.c.b16 %v1104, %v1103
    %v1480 = vpack.c.b16 %v1106, %v1105
    %v1481 = vpack.c.b16 %v1108, %v1107
    %v1482 = vpack.c.b16 %v1110, %v1109
    %v1483 = vpack.c.b16 %v1112, %v1111
    %v1484 = vpack.c.b16 %v1114, %v1113
    %v1485 = vpack.c.b16 %v1116, %v1115
    %v1486 = vpack.c.b16 %v1118, %v1117
    %v1487 = vpack.c.b16 %v1120, %v1119
    %v1488 = vpack.c.b16 %v1122, %v1121
    %v1489 = vpack.c.b16 %v1124, %v1123
    %v1490 = vpack.c.b16 %v1126, %v1125
    %v1491 = vpack.c.b16 %v1128, %v1127
    %v1492 = vpack.c.b16 %v1130, %v1129
    %v1493 = vpack.c.b16 %v1132, %v1131
    %v1494 = vpack.c.b16 %v1134, %v1133
    %v1495 = vpack.c.b16 %v1136, %v1135
    %v1496 = vpack.c.b16 %v1138, %v1137
    %v1497 = vpack.c.b16 %v1140, %v1139
    %v1498 = vpack.c.b16 %v1142, %v1141
    %v1499 = vpack.c.b16 %v1144, %v1143
    %v1500 = vpack.c.b16 %v1146, %v1145
    %v1501 = vpack.c.b16 %v1148, %v1147
    %v1502 = vpack.c.b16 %v1150, %v1149
    %v1503 = vpack.c.b16 %v1152, %v1151
    %v1504 = vpack.c.b16 %v1154, %v1153
    %v1505 = vpack.c.b16 %v1156, %v1155
    %v1506 = vpack.c.b16 %v1158, %v1157
    %v1507 = vpack.c.b16 %v1160, %v1159
    %v1508 = vpack.c.b16 %v1162, %v1161
    %v1509 = vpack.c.b16 %v1164, %v1163
    %v1510 = vpack.c.b16 %v1166, %v1165
    %v1511 = vpack.c.b16 %v1168, %v1167
    %v1512 = vpack.c.b16 %v1170, %v1169
    %v1513 = vpack.c.b16 %v1172, %v1171
    %v1514 = vpack.c.b16 %v1174, %v1173
    %v1515 = vpack.c.b16 %v1176, %v1175
    %v1516 = vpack.c.b16 %v1178, %v1177
    %v1517 = vpack.c.b16 %v1180, %v1179
    %v1518 = vpack.c.b16 %v1182, %v1181
    %v1519 = vpack.c.b16 %v1184, %v1183
    %v1520 = vpack.c.b16 %v1186, %v1185
    %v1521 = vpack.c.b16 %v1188, %v1187
    %v1522 = vpack.c.b16 %v1190, %v1189
    %v1523 = vpack.c.b16 %v1192, %v1191
    %v1524 = vpack.c.b16 %v1194, %v1193
    %v1525 = vpack.c.b16 %v1196, %v1195
    %v1526 = vpack.c.b16 %v1198, %v1197
    %v1527 = vpack.c.b16 %v1200, %v1199
    %v1528 = vpack.c.b16 %v1202, %v1201
    %v1529 = vpack.c.b16 %v1204, %v1203
    %v1530 = vpack.c.b16 %v1206, %v1205
    %v1531 = vpack.c.b16 %v1208, %v1207
    %v1532 = vpack.c.b16 %v1210, %v1209
    %v1533 = vpack.c.b16 %v1212, %v1211
    %v1534 = vpack.c.b16 %v1214, %v1213
    %v1535 = vpack.c.b16 %v1216, %v1215
    %v1536 = vpack.c.b16 %v1218, %v1217
    %v1537 = vpack.c.b16 %v1220, %v1219
    %v1538 = vpack.c.b16 %v1222, %v1221
    %v1539 = vpack.c.b16 %v1224, %v1223
    %v1540 = vpack.c.b16 %v1226, %v1225
    %v1541 = vpack.c.b16 %v1228, %v1227
    %v1542 = vpack.c.b16 %v1230, %v1229
    %v1543 = vpack.c.b16 %v1232, %v1231
    %v1544 = vpack.c.b16 %v1234, %v1233
    %v1545 = vpack.c.b16 %v1236, %v1235
    %v1546 = vpack.c.b16 %v1238, %v1237
    %v1547 = vpack.c.b16 %v1240, %v1239
    %v1548 = vpack.c.b16 %v1242, %v1241
    %v1549 = vpack.c.b16 %v1244, %v1243
    %v1550 = vpack.c.b16 %v1246, %v1245
    %v1551 = vpack.c.b16 %v1248, %v1247
    %v1552 = vpack.c.b16 %v1250, %v1249
    %v1553 = vpack.c.b16 %v1252, %v1251
    %v1554 = vpack.c.b16 %v1254, %v1253
    %v1555 = vpack.c.b16 %v1256, %v1255
    %v1556 = vpack.c.b16 %v1258, %v1257
    %v1557 = vpack.c.b16 %v1260, %v1259
    %v1558 = vpack.c.b16 %v1262, %v1261
    %v1559 = vpack.c.b16 %v1264, %v1263
    %v1560 = vpack.c.b16 %v1266, %v1265
    %v1561 = vpack.c.b16 %v1268, %v1267
    %v1562 = vpack.c.b16 %v1270, %v1269
    %v1563 = vpack.c.b16 %v1272, %v1271
    %v1564 = vpack.c.b16 %v1274, %v1273
    %v1565 = vpack.c.b16 %v1276, %v1275
    %v1566 = vpack.c.b16 %v1278, %v1277
    %v1567 = vpack.c.b16 %v1280, %v1279
    %v1568 = vpack.c.b16 %v1282, %v1281
    %v1569 = vpack.c.b16 %v1284, %v1283
    %v1570 = vpack.c.b16 %v1286, %v1285
    %v1571 = vpack.c.b16 %v1288, %v1287
    %v1572 = vpack.c.b16 %v1290, %v1289
    %v1573 = vpack.c.b16 %v1292, %v1291
    %v1574 = vpack.c.b16 %v1294, %v1293
    %v1575 = vpack.c.b16 %v1296, %v1295
    %v1576 = vpack.c.b16 %v1298, %v1297
    %v1577 = vpack.c.b16 %v1300, %v1299
    %v1578 = vpack.c.b16 %v1302, %v1301
    %v1579 = vpack.c.b16 %v1304, %v1303
    %v1580 = vpack.c.b16 %v1306, %v1305
    %v1581 = vpack.c.b16 %v1308, %v1307
    %v1582 = vpack.c.b16 %v1310, %v1309
    %v1583 = vpack.c.b16 %v1312, %v1311
    %v1584 = vpack.c.b16 %v1314, %v1313
    %v1585 = vpack.c.b16 %v1316, %v1315
    %v1586 = vpack.c.b16 %v1318, %v1317
    %v1587 = vpack.c.b16 %v1320, %v1319
    %v1588 = vpack.c.b16 %v1322, %v1321
    %v1589 = vpack.c.b16 %v1324, %v1323
    %v1590 = vpack.c.b16 %v1326, %v1325
    %v1591 = vpack.c.b16 %v1328, %v1327
    %v1592 = vpack.c.b16 %v1330, %v1329
    %v1593 = vpack.c.b16 %v1332, %v1331
    %v1594 = vpack.c.b16 %v1334, %v1333
    %v1595 = vpack.c.b16 %v1336, %v1335
    %v1596 = vpack.c.b16 %v1338, %v1337
    %v1597 = vpack.c.b16 %v1340, %v1339
    %v1598 = vpack.c.b16 %v1342, %v1341
    %v1599 = vpack.c.b16 %v1344, %v1343
    %v1600 = vpack.c.b16 %v1346, %v1345
    %v1601 = vpack.c.b16 %v1348, %v1347
    %v1602 = vpack.c.b16 %v1350, %v1349
    %v1603 = vpack.c.b16 %v1352, %v1351
    %v1604 = vpack.c.b16 %v1354, %v1353
    %v1605 = vpack.c.b16 %v1356, %v1355
    %v1606 = vpack.c.b16 %v1358, %v1357
    %v1607 = vpack.c.b16 %v1360, %v1359
    %v1608 = vpack.c.b16 %v1362, %v1361
    %v1609 = vpack.c.b16 %v1364, %v1363
    %v1610 = vpack.c.b16 %v1366, %v1365
    %v1611 = vpack.c.b16 %v1368, %v1367
    %v1612 = vpack.c.b16 %v1370, %v1369
    %v1613 = vpack.c.b16 %v1372, %v1371
    %v1614 = vpack.c.b16 %v1374, %v1373
    %v1615 = vpack.c.b16 %v1376, %v1375
    %v1616 = vpack.c.b16 %v1378, %v1377
    %v1617 = vpack.c.b16 %v1380, %v1379
    %v1618 = vpack.c.b16 %v1382, %v1381
    %v1619 = vpack.c.b16 %v1384, %v1383
    %v1620 = vpack.c.b16 %v1386, %v1385
    %v1621 = vpack.c.b16 %v1388, %v1387
    %v1622 = vpack.c.b16 %v1390, %v1389
    %v1623 = vpack.c.b16 %v1392, %v1391
    %v1624 = vpack.c.b16 %v1394, %v1393
    %v1625 = vpack.c.b16 %v1396, %v1395
    %v1626 = vpack.c.b16 %v1398, %v1397
    %v1627 = vpack.c.b16 %v1400, %v1399
    %v1628 = vpack.c.b16 %v1402, %v1401
    %v1629 = vpack.c.b16 %v1404, %v1403
    %v1630 = vpack.c.b16 %v1406, %v1405
    %v1631 = vpack.c.b16 %v1408, %v1407
    %v1632 = vpack.c.b16 %v1410, %v1409
    %v1633 = vpack.c.b16 %v1412, %v1411
    %v1634 = vpack.c.b16 %v1414, %v1413
    %v1635 = vpack.c.b16 %v1416, %v1415
    %v1636 = vpack.c.b16 %v1418, %v1417
    %v1637 = vpack.c.b16 %v1420, %v1419
    %v1638 = vpack.c.b16 %v1422, %v1421
    %v1639 = vpack.c.b16 %v1424, %v1423
    %v1640 = vpack.c.b16 %v1426, %v1425
    %v1641 = vpack.c.b16 %v1428, %v1427
    %v1642 = vpack.c.b16 %v1430, %v1429
    %v1643 = vpack.c.b16 %v1432, %v1431
    %v1644 = vpack.c.b16 %v1434, %v1433
    %v1645 = vpack.c.b16 %v1436, %v1435
    %v1646 = vpack.c.b16 %v1438, %v1437
    %v1647 = vpack.c.b16 %v1440, %v1439
    %v1648 = vpack.c.b16 %v1442, %v1441
    %v1649 = vpack.c.b16 %v1444, %v1443
    %v1650 = vpack.c.b16 %v1446, %v1445
    %v1651 = vpack.c.b16 %v1448, %v1447
    %v1652 = vpack.c.b16 %v1450, %v1449
    %v1653 = vpack.c.b16 %v1452, %v1451
    %v1654 = vpack.c.b16 %v1454, %v1453
    %v1655 = vpack.c.b16 %v1456, %v1455
    %v1656 = vpack.c.b16 %v1458, %v1457
    %v1657 = vpack.c.b16 %v1460, %v1459
    %v1658 = vpack.c.b16 %v1462, %v1461
    %v1659 = vpack.c.b16 %v1464, %v1463
    %v1660 = vpack.c.b16 %v1466, %v1465
    %v1661 = vpack.c.b16 %v1468, %v1467
    %v1662 = vpack.c.b16 %v1470, %v1469
    %1855 = vmatprep.subr.bf16.mxu0 0
    %1856 = vmatpush1.bf16.msra.mxu0 %v1478
    %1857 = vmatprep.subr.bf16.mxu0 0
    %1858 = vmatpush1.bf16.msra.mxu0 %v1477
    %1859 = vmatprep.subr.bf16.mxu0 0
    %1860 = vmatpush1.bf16.msra.mxu0 %v1476
    %1861 = vmatprep.subr.bf16.mxu0 0
    %1862 = vmatpush1.bf16.msra.mxu0 %v1475
    %1863 = vmatprep.subr.bf16.mxu0 0
    %1864 = vmatpush1.bf16.msra.mxu0 %v1474
    %1865 = vmatprep.subr.bf16.mxu0 0
    %1866 = vmatpush1.bf16.msra.mxu0 %v1473
    %1867 = vmatprep.subr.bf16.mxu0 0
    %1868 = vmatpush1.bf16.msra.mxu0 %v1472
    %1869 = vmatprep.subr.bf16.mxu0 0
    %1870 = vmatpush1.bf16.msra.mxu0 %v1471
    %1871 = vmatprep.subr.bf16.mxu0 0
    %1872 = vmatpush2.bf16.msra.mxu0 %v1486
    %1873 = vmatprep.subr.bf16.mxu0 0
    %1874 = vmatpush2.bf16.msra.mxu0 %v1485
    %1875 = vmatprep.subr.bf16.mxu0 0
    %1876 = vmatpush2.bf16.msra.mxu0 %v1484
    %1877 = vmatprep.subr.bf16.mxu0 0
    %1878 = vmatpush2.bf16.msra.mxu0 %v1483
    %1879 = vmatprep.subr.bf16.mxu0 0
    %1880 = vmatpush2.bf16.msra.mxu0 %v1482
    %1881 = vmatprep.subr.bf16.mxu0 0
    %1882 = vmatpush2.bf16.msra.mxu0 %v1481
    %1883 = vmatprep.subr.bf16.mxu0 0
    %1884 = vmatpush2.bf16.msra.mxu0 %v1480
    %1885 = vmatprep.subr.bf16.mxu0 0
    %1886 = vmatpush2.bf16.msra.mxu0 %v1479
    %1887 = vmatprep.mubr.bf16.mxu0 %v608
    %1888 = vmatmul.mubr.bf16.gmra.mxu0 %v607
    %v1889 = vpop.f32.mrf.mxu0
    %v1890 = vadd.f32 %v497, %v1889
    %v1891 = vpop.f32.mrf.mxu0
    %v1892 = vpop.f32.mrf.mxu0
    %v1893 = vadd.f32 %v497, %v1892
    %v1894 = vpop.f32.mrf.mxu0
    %1895 = vmatprep.mubr.bf16.mxu0 %v632
    %1896 = vmatmul.mubr.bf16.gmra.mxu0 %v631
    %v1897 = vpop.f32.mrf.mxu0
    %v1898 = vadd.f32 %v497, %v1897
    %v1899 = vpop.f32.mrf.mxu0
    %v1900 = vpop.f32.mrf.mxu0
    %v1901 = vpop.f32.mrf.mxu0
    %1902 = vdwg.mxu0
    %1903 = vmatprep.subr.bf16.mxu0 0
    %1904 = vmatpush1.bf16.msra.mxu0 %v1494
    %1905 = vmatprep.subr.bf16.mxu0 0
    %1906 = vmatpush1.bf16.msra.mxu0 %v1493
    %1907 = vmatprep.subr.bf16.mxu0 0
    %1908 = vmatpush1.bf16.msra.mxu0 %v1492
    %1909 = vmatprep.subr.bf16.mxu0 0
    %1910 = vmatpush1.bf16.msra.mxu0 %v1491
    %1911 = vmatprep.subr.bf16.mxu0 0
    %1912 = vmatpush1.bf16.msra.mxu0 %v1490
    %1913 = vmatprep.subr.bf16.mxu0 0
    %1914 = vmatpush1.bf16.msra.mxu0 %v1489
    %1915 = vmatprep.subr.bf16.mxu0 0
    %1916 = vmatpush1.bf16.msra.mxu0 %v1488
    %1917 = vmatprep.subr.bf16.mxu0 0
    %1918 = vmatpush1.bf16.msra.mxu0 %v1487
    %1919 = vmatprep.subr.bf16.mxu0 0
    %1920 = vmatpush2.bf16.msra.mxu0 %v1502
    %1921 = vmatprep.subr.bf16.mxu0 0
    %1922 = vmatpush2.bf16.msra.mxu0 %v1501
    %1923 = vmatprep.subr.bf16.mxu0 0
    %1924 = vmatpush2.bf16.msra.mxu0 %v1500
    %1925 = vmatprep.subr.bf16.mxu0 0
    %1926 = vmatpush2.bf16.msra.mxu0 %v1499
    %1927 = vmatprep.subr.bf16.mxu0 0
    %1928 = vmatpush2.bf16.msra.mxu0 %v1498
    %1929 = vmatprep.subr.bf16.mxu0 0
    %1930 = vmatpush2.bf16.msra.mxu0 %v1497
    %1931 = vmatprep.subr.bf16.mxu0 0
    %1932 = vmatpush2.bf16.msra.mxu0 %v1496
    %1933 = vmatprep.subr.bf16.mxu0 0
    %1934 = vmatpush2.bf16.msra.mxu0 %v1495
    %1935 = vmatprep.mubr.bf16.mxu0 %v610
    %1936 = vmatmul.mubr.bf16.gmra.mxu0 %v609
    %v1937 = vpop.f32.mrf.mxu0
    %v1938 = vadd.f32 %v1890, %v1937
    %v1939 = vpop.f32.mrf.mxu0
    %v1940 = vpop.f32.mrf.mxu0
    %v1941 = vadd.f32 %v1893, %v1940
    %v1942 = vpop.f32.mrf.mxu0
    %1943 = vmatprep.mubr.bf16.mxu0 %v634
    %1944 = vmatmul.mubr.bf16.gmra.mxu0 %v633
    %v1945 = vpop.f32.mrf.mxu0
    %v1946 = vadd.f32 %v1898, %v1945
    %v1947 = vpop.f32.mrf.mxu0
    %v1948 = vpop.f32.mrf.mxu0
    %v1949 = vpop.f32.mrf.mxu0
    %1950 = vdwg.mxu0
    %1951 = vmatprep.subr.bf16.mxu0 0
    %1952 = vmatpush1.bf16.msra.mxu0 %v1510
    %1953 = vmatprep.subr.bf16.mxu0 0
    %1954 = vmatpush1.bf16.msra.mxu0 %v1509
    %1955 = vmatprep.subr.bf16.mxu0 0
    %1956 = vmatpush1.bf16.msra.mxu0 %v1508
    %1957 = vmatprep.subr.bf16.mxu0 0
    %1958 = vmatpush1.bf16.msra.mxu0 %v1507
    %1959 = vmatprep.subr.bf16.mxu0 0
    %1960 = vmatpush1.bf16.msra.mxu0 %v1506
    %1961 = vmatprep.subr.bf16.mxu0 0
    %1962 = vmatpush1.bf16.msra.mxu0 %v1505
    %1963 = vmatprep.subr.bf16.mxu0 0
    %1964 = vmatpush1.bf16.msra.mxu0 %v1504
    %1965 = vmatprep.subr.bf16.mxu0 0
    %1966 = vmatpush1.bf16.msra.mxu0 %v1503
    %1967 = vmatprep.subr.bf16.mxu0 0
    %1968 = vmatpush2.bf16.msra.mxu0 %v1518
    %1969 = vmatprep.subr.bf16.mxu0 0
    %1970 = vmatpush2.bf16.msra.mxu0 %v1517
    %1971 = vmatprep.subr.bf16.mxu0 0
    %1972 = vmatpush2.bf16.msra.mxu0 %v1516
    %1973 = vmatprep.subr.bf16.mxu0 0
    %1974 = vmatpush2.bf16.msra.mxu0 %v1515
    %1975 = vmatprep.subr.bf16.mxu0 0
    %1976 = vmatpush2.bf16.msra.mxu0 %v1514
    %1977 = vmatprep.subr.bf16.mxu0 0
    %1978 = vmatpush2.bf16.msra.mxu0 %v1513
    %1979 = vmatprep.subr.bf16.mxu0 0
    %1980 = vmatpush2.bf16.msra.mxu0 %v1512
    %1981 = vmatprep.subr.bf16.mxu0 0
    %1982 = vmatpush2.bf16.msra.mxu0 %v1511
    %1983 = vmatprep.mubr.bf16.mxu0 %v612
    %1984 = vmatmul.mubr.bf16.gmra.mxu0 %v611
    %v1985 = vpop.f32.mrf.mxu0
    %v1986 = vadd.f32 %v1938, %v1985
    %v1987 = vpop.f32.mrf.mxu0
    %v1988 = vpop.f32.mrf.mxu0
    %v1989 = vadd.f32 %v1941, %v1988
    %v1990 = vpop.f32.mrf.mxu0
    %1991 = vmatprep.mubr.bf16.mxu0 %v636
    %1992 = vmatmul.mubr.bf16.gmra.mxu0 %v635
    %v1993 = vpop.f32.mrf.mxu0
    %v1994 = vadd.f32 %v1946, %v1993
    %v1995 = vpop.f32.mrf.mxu0
    %v1996 = vpop.f32.mrf.mxu0
    %v1997 = vpop.f32.mrf.mxu0
    %1998 = vdwg.mxu0
    %1999 = vmatprep.subr.bf16.mxu0 0
    %2000 = vmatpush1.bf16.msra.mxu0 %v1526
    %2001 = vmatprep.subr.bf16.mxu0 0
    %2002 = vmatpush1.bf16.msra.mxu0 %v1525
    %2003 = vmatprep.subr.bf16.mxu0 0
    %2004 = vmatpush1.bf16.msra.mxu0 %v1524
    %2005 = vmatprep.subr.bf16.mxu0 0
    %2006 = vmatpush1.bf16.msra.mxu0 %v1523
    %2007 = vmatprep.subr.bf16.mxu0 0
    %2008 = vmatpush1.bf16.msra.mxu0 %v1522
    %2009 = vmatprep.subr.bf16.mxu0 0
    %2010 = vmatpush1.bf16.msra.mxu0 %v1521
    %2011 = vmatprep.subr.bf16.mxu0 0
    %2012 = vmatpush1.bf16.msra.mxu0 %v1520
    %2013 = vmatprep.subr.bf16.mxu0 0
    %2014 = vmatpush1.bf16.msra.mxu0 %v1519
    %2015 = vmatprep.subr.bf16.mxu0 0
    %2016 = vmatpush2.bf16.msra.mxu0 %v1534
    %2017 = vmatprep.subr.bf16.mxu0 0
    %2018 = vmatpush2.bf16.msra.mxu0 %v1533
    %2019 = vmatprep.subr.bf16.mxu0 0
    %2020 = vmatpush2.bf16.msra.mxu0 %v1532
    %2021 = vmatprep.subr.bf16.mxu0 0
    %2022 = vmatpush2.bf16.msra.mxu0 %v1531
    %2023 = vmatprep.subr.bf16.mxu0 0
    %2024 = vmatpush2.bf16.msra.mxu0 %v1530
    %2025 = vmatprep.subr.bf16.mxu0 0
    %2026 = vmatpush2.bf16.msra.mxu0 %v1529
    %2027 = vmatprep.subr.bf16.mxu0 0
    %2028 = vmatpush2.bf16.msra.mxu0 %v1528
    %2029 = vmatprep.subr.bf16.mxu0 0
    %2030 = vmatpush2.bf16.msra.mxu0 %v1527
    %2031 = vmatprep.mubr.bf16.mxu0 %v614
    %2032 = vmatmul.mubr.bf16.gmra.mxu0 %v613
    %v2033 = vpop.f32.mrf.mxu0
    %v2034 = vadd.f32 %v1986, %v2033
    %v2035 = vpop.f32.mrf.mxu0
    %v2036 = vpop.f32.mrf.mxu0
    %v2037 = vadd.f32 %v1989, %v2036
    %v2038 = vpop.f32.mrf.mxu0
    %2039 = vmatprep.mubr.bf16.mxu0 %v638
    %2040 = vmatmul.mubr.bf16.gmra.mxu0 %v637
    %v2041 = vpop.f32.mrf.mxu0
    %v2042 = vadd.f32 %v1994, %v2041
    %v2043 = vpop.f32.mrf.mxu0
    %v2044 = vpop.f32.mrf.mxu0
    %v2045 = vpop.f32.mrf.mxu0
    %2046 = vdwg.mxu0
    %2047 = vmatprep.subr.bf16.mxu0 0
    %2048 = vmatpush1.bf16.msra.mxu0 %v1542
    %2049 = vmatprep.subr.bf16.mxu0 0
    %2050 = vmatpush1.bf16.msra.mxu0 %v1541
    %2051 = vmatprep.subr.bf16.mxu0 0
    %2052 = vmatpush1.bf16.msra.mxu0 %v1540
    %2053 = vmatprep.subr.bf16.mxu0 0
    %2054 = vmatpush1.bf16.msra.mxu0 %v1539
    %2055 = vmatprep.subr.bf16.mxu0 0
    %2056 = vmatpush1.bf16.msra.mxu0 %v1538
    %2057 = vmatprep.subr.bf16.mxu0 0
    %2058 = vmatpush1.bf16.msra.mxu0 %v1537
    %2059 = vmatprep.subr.bf16.mxu0 0
    %2060 = vmatpush1.bf16.msra.mxu0 %v1536
    %2061 = vmatprep.subr.bf16.mxu0 0
    %2062 = vmatpush1.bf16.msra.mxu0 %v1535
    %2063 = vmatprep.subr.bf16.mxu0 0
    %2064 = vmatpush2.bf16.msra.mxu0 %v1550
    %2065 = vmatprep.subr.bf16.mxu0 0
    %2066 = vmatpush2.bf16.msra.mxu0 %v1549
    %2067 = vmatprep.subr.bf16.mxu0 0
    %2068 = vmatpush2.bf16.msra.mxu0 %v1548
    %2069 = vmatprep.subr.bf16.mxu0 0
    %2070 = vmatpush2.bf16.msra.mxu0 %v1547
    %2071 = vmatprep.subr.bf16.mxu0 0
    %2072 = vmatpush2.bf16.msra.mxu0 %v1546
    %2073 = vmatprep.subr.bf16.mxu0 0
    %2074 = vmatpush2.bf16.msra.mxu0 %v1545
    %2075 = vmatprep.subr.bf16.mxu0 0
    %2076 = vmatpush2.bf16.msra.mxu0 %v1544
    %2077 = vmatprep.subr.bf16.mxu0 0
    %2078 = vmatpush2.bf16.msra.mxu0 %v1543
    %2079 = vmatprep.mubr.bf16.mxu0 %v616
    %2080 = vmatmul.mubr.bf16.gmra.mxu0 %v615
    %v2081 = vpop.f32.mrf.mxu0
    %v2082 = vadd.f32 %v2034, %v2081
    %v2083 = vpop.f32.mrf.mxu0
    %v2084 = vpop.f32.mrf.mxu0
    %v2085 = vadd.f32 %v2037, %v2084
    %v2086 = vpop.f32.mrf.mxu0
    %2087 = vmatprep.mubr.bf16.mxu0 %v640
    %2088 = vmatmul.mubr.bf16.gmra.mxu0 %v639
    %v2089 = vpop.f32.mrf.mxu0
    %v2090 = vadd.f32 %v2042, %v2089
    %v2091 = vpop.f32.mrf.mxu0
    %v2092 = vpop.f32.mrf.mxu0
    %v2093 = vpop.f32.mrf.mxu0
    %2094 = vdwg.mxu0
    %2095 = vmatprep.subr.bf16.mxu0 0
    %2096 = vmatpush1.bf16.msra.mxu0 %v1558
    %2097 = vmatprep.subr.bf16.mxu0 0
    %2098 = vmatpush1.bf16.msra.mxu0 %v1557
    %2099 = vmatprep.subr.bf16.mxu0 0
    %2100 = vmatpush1.bf16.msra.mxu0 %v1556
    %2101 = vmatprep.subr.bf16.mxu0 0
    %2102 = vmatpush1.bf16.msra.mxu0 %v1555
    %2103 = vmatprep.subr.bf16.mxu0 0
    %2104 = vmatpush1.bf16.msra.mxu0 %v1554
    %2105 = vmatprep.subr.bf16.mxu0 0
    %2106 = vmatpush1.bf16.msra.mxu0 %v1553
    %2107 = vmatprep.subr.bf16.mxu0 0
    %2108 = vmatpush1.bf16.msra.mxu0 %v1552
    %2109 = vmatprep.subr.bf16.mxu0 0
    %2110 = vmatpush1.bf16.msra.mxu0 %v1551
    %2111 = vmatprep.subr.bf16.mxu0 0
    %2112 = vmatpush2.bf16.msra.mxu0 %v1566
    %2113 = vmatprep.subr.bf16.mxu0 0
    %2114 = vmatpush2.bf16.msra.mxu0 %v1565
    %2115 = vmatprep.subr.bf16.mxu0 0
    %2116 = vmatpush2.bf16.msra.mxu0 %v1564
    %2117 = vmatprep.subr.bf16.mxu0 0
    %2118 = vmatpush2.bf16.msra.mxu0 %v1563
    %2119 = vmatprep.subr.bf16.mxu0 0
    %2120 = vmatpush2.bf16.msra.mxu0 %v1562
    %2121 = vmatprep.subr.bf16.mxu0 0
    %2122 = vmatpush2.bf16.msra.mxu0 %v1561
    %2123 = vmatprep.subr.bf16.mxu0 0
    %2124 = vmatpush2.bf16.msra.mxu0 %v1560
    %2125 = vmatprep.subr.bf16.mxu0 0
    %2126 = vmatpush2.bf16.msra.mxu0 %v1559
    %2127 = vmatprep.mubr.bf16.mxu0 %v618
    %2128 = vmatmul.mubr.bf16.gmra.mxu0 %v617
    %v2129 = vpop.f32.mrf.mxu0
    %v2130 = vadd.f32 %v2082, %v2129
    %v2131 = vpop.f32.mrf.mxu0
    %v2132 = vpop.f32.mrf.mxu0
    %v2133 = vadd.f32 %v2085, %v2132
    %v2134 = vpop.f32.mrf.mxu0
    %2135 = vmatprep.mubr.bf16.mxu0 %v642
    %2136 = vmatmul.mubr.bf16.gmra.mxu0 %v641
    %v2137 = vpop.f32.mrf.mxu0
    %v2138 = vadd.f32 %v2090, %v2137
    %v2139 = vpop.f32.mrf.mxu0
    %v2140 = vpop.f32.mrf.mxu0
    %v2141 = vpop.f32.mrf.mxu0
    %2142 = vdwg.mxu0
    %2143 = vmatprep.subr.bf16.mxu0 0
    %2144 = vmatpush1.bf16.msra.mxu0 %v1574
    %2145 = vmatprep.subr.bf16.mxu0 0
    %2146 = vmatpush1.bf16.msra.mxu0 %v1573
    %2147 = vmatprep.subr.bf16.mxu0 0
    %2148 = vmatpush1.bf16.msra.mxu0 %v1572
    %2149 = vmatprep.subr.bf16.mxu0 0
    %2150 = vmatpush1.bf16.msra.mxu0 %v1571
    %2151 = vmatprep.subr.bf16.mxu0 0
    %2152 = vmatpush1.bf16.msra.mxu0 %v1570
    %2153 = vmatprep.subr.bf16.mxu0 0
    %2154 = vmatpush1.bf16.msra.mxu0 %v1569
    %2155 = vmatprep.subr.bf16.mxu0 0
    %2156 = vmatpush1.bf16.msra.mxu0 %v1568
    %2157 = vmatprep.subr.bf16.mxu0 0
    %2158 = vmatpush1.bf16.msra.mxu0 %v1567
    %2159 = vmatprep.subr.bf16.mxu0 0
    %2160 = vmatpush2.bf16.msra.mxu0 %v1582
    %2161 = vmatprep.subr.bf16.mxu0 0
    %2162 = vmatpush2.bf16.msra.mxu0 %v1581
    %2163 = vmatprep.subr.bf16.mxu0 0
    %2164 = vmatpush2.bf16.msra.mxu0 %v1580
    %2165 = vmatprep.subr.bf16.mxu0 0
    %2166 = vmatpush2.bf16.msra.mxu0 %v1579
    %2167 = vmatprep.subr.bf16.mxu0 0
    %2168 = vmatpush2.bf16.msra.mxu0 %v1578
    %2169 = vmatprep.subr.bf16.mxu0 0
    %2170 = vmatpush2.bf16.msra.mxu0 %v1577
    %2171 = vmatprep.subr.bf16.mxu0 0
    %2172 = vmatpush2.bf16.msra.mxu0 %v1576
    %2173 = vmatprep.subr.bf16.mxu0 0
    %2174 = vmatpush2.bf16.msra.mxu0 %v1575
    %2175 = vmatprep.mubr.bf16.mxu0 %v620
    %2176 = vmatmul.mubr.bf16.gmra.mxu0 %v619
    %v2177 = vpop.f32.mrf.mxu0
    %v2178 = vadd.f32 %v2130, %v2177
    %v2179 = vpop.f32.mrf.mxu0
    %v2180 = vpop.f32.mrf.mxu0
    %v2181 = vadd.f32 %v2133, %v2180
    %v2182 = vpop.f32.mrf.mxu0
    %2183 = vmatprep.mubr.bf16.mxu0 %v644
    %2184 = vmatmul.mubr.bf16.gmra.mxu0 %v643
    %v2185 = vpop.f32.mrf.mxu0
    %v2186 = vadd.f32 %v2138, %v2185
    %v2187 = vpop.f32.mrf.mxu0
    %v2188 = vpop.f32.mrf.mxu0
    %v2189 = vpop.f32.mrf.mxu0
    %2190 = vdwg.mxu0
    %2191 = vmatprep.subr.bf16.mxu0 0
    %2192 = vmatpush1.bf16.msra.mxu0 %v1590
    %2193 = vmatprep.subr.bf16.mxu0 0
    %2194 = vmatpush1.bf16.msra.mxu0 %v1589
    %2195 = vmatprep.subr.bf16.mxu0 0
    %2196 = vmatpush1.bf16.msra.mxu0 %v1588
    %2197 = vmatprep.subr.bf16.mxu0 0
    %2198 = vmatpush1.bf16.msra.mxu0 %v1587
    %2199 = vmatprep.subr.bf16.mxu0 0
    %2200 = vmatpush1.bf16.msra.mxu0 %v1586
    %2201 = vmatprep.subr.bf16.mxu0 0
    %2202 = vmatpush1.bf16.msra.mxu0 %v1585
    %2203 = vmatprep.subr.bf16.mxu0 0
    %2204 = vmatpush1.bf16.msra.mxu0 %v1584
    %2205 = vmatprep.subr.bf16.mxu0 0
    %2206 = vmatpush1.bf16.msra.mxu0 %v1583
    %2207 = vmatprep.subr.bf16.mxu0 0
    %2208 = vmatpush2.bf16.msra.mxu0 %v1598
    %2209 = vmatprep.subr.bf16.mxu0 0
    %2210 = vmatpush2.bf16.msra.mxu0 %v1597
    %2211 = vmatprep.subr.bf16.mxu0 0
    %2212 = vmatpush2.bf16.msra.mxu0 %v1596
    %2213 = vmatprep.subr.bf16.mxu0 0
    %2214 = vmatpush2.bf16.msra.mxu0 %v1595
    %2215 = vmatprep.subr.bf16.mxu0 0
    %2216 = vmatpush2.bf16.msra.mxu0 %v1594
    %2217 = vmatprep.subr.bf16.mxu0 0
    %2218 = vmatpush2.bf16.msra.mxu0 %v1593
    %2219 = vmatprep.subr.bf16.mxu0 0
    %2220 = vmatpush2.bf16.msra.mxu0 %v1592
    %2221 = vmatprep.subr.bf16.mxu0 0
    %2222 = vmatpush2.bf16.msra.mxu0 %v1591
    %2223 = vmatprep.mubr.bf16.mxu0 %v622
    %2224 = vmatmul.mubr.bf16.gmra.mxu0 %v621
    %v2225 = vpop.f32.mrf.mxu0
    %v2226 = vadd.f32 %v2178, %v2225
    %v2227 = vpop.f32.mrf.mxu0
    %v2228 = vpop.f32.mrf.mxu0
    %v2229 = vadd.f32 %v2181, %v2228
    %v2230 = vpop.f32.mrf.mxu0
    %2231 = vmatprep.mubr.bf16.mxu0 %v646
    %2232 = vmatmul.mubr.bf16.gmra.mxu0 %v645
    %v2233 = vpop.f32.mrf.mxu0
    %v2234 = vadd.f32 %v2186, %v2233
    %v2235 = vpop.f32.mrf.mxu0
    %v2236 = vpop.f32.mrf.mxu0
    %v2237 = vpop.f32.mrf.mxu0
    %2238 = vdwg.mxu0
    %2239 = vmatprep.subr.bf16.mxu0 0
    %2240 = vmatpush1.bf16.msra.mxu0 %v1606
    %2241 = vmatprep.subr.bf16.mxu0 0
    %2242 = vmatpush1.bf16.msra.mxu0 %v1605
    %2243 = vmatprep.subr.bf16.mxu0 0
    %2244 = vmatpush1.bf16.msra.mxu0 %v1604
    %2245 = vmatprep.subr.bf16.mxu0 0
    %2246 = vmatpush1.bf16.msra.mxu0 %v1603
    %2247 = vmatprep.subr.bf16.mxu0 0
    %2248 = vmatpush1.bf16.msra.mxu0 %v1602
    %2249 = vmatprep.subr.bf16.mxu0 0
    %2250 = vmatpush1.bf16.msra.mxu0 %v1601
    %2251 = vmatprep.subr.bf16.mxu0 0
    %2252 = vmatpush1.bf16.msra.mxu0 %v1600
    %2253 = vmatprep.subr.bf16.mxu0 0
    %2254 = vmatpush1.bf16.msra.mxu0 %v1599
    %2255 = vmatprep.subr.bf16.mxu0 0
    %2256 = vmatpush2.bf16.msra.mxu0 %v1614
    %2257 = vmatprep.subr.bf16.mxu0 0
    %2258 = vmatpush2.bf16.msra.mxu0 %v1613
    %2259 = vmatprep.subr.bf16.mxu0 0
    %2260 = vmatpush2.bf16.msra.mxu0 %v1612
    %2261 = vmatprep.subr.bf16.mxu0 0
    %2262 = vmatpush2.bf16.msra.mxu0 %v1611
    %2263 = vmatprep.subr.bf16.mxu0 0
    %2264 = vmatpush2.bf16.msra.mxu0 %v1610
    %2265 = vmatprep.subr.bf16.mxu0 0
    %2266 = vmatpush2.bf16.msra.mxu0 %v1609
    %2267 = vmatprep.subr.bf16.mxu0 0
    %2268 = vmatpush2.bf16.msra.mxu0 %v1608
    %2269 = vmatprep.subr.bf16.mxu0 0
    %2270 = vmatpush2.bf16.msra.mxu0 %v1607
    %2271 = vmatprep.mubr.bf16.mxu0 %v624
    %2272 = vmatmul.mubr.bf16.gmra.mxu0 %v623
    %v2273 = vpop.f32.mrf.mxu0
    %v2274 = vadd.f32 %v2226, %v2273
    %v2275 = vpop.f32.mrf.mxu0
    %v2276 = vpop.f32.mrf.mxu0
    %v2277 = vadd.f32 %v2229, %v2276
    %v2278 = vpop.f32.mrf.mxu0
    %2279 = vmatprep.mubr.bf16.mxu0 %v648
    %2280 = vmatmul.mubr.bf16.gmra.mxu0 %v647
    %v2281 = vpop.f32.mrf.mxu0
    %v2282 = vadd.f32 %v2234, %v2281
    %v2283 = vpop.f32.mrf.mxu0
    %v2284 = vpop.f32.mrf.mxu0
    %v2285 = vpop.f32.mrf.mxu0
    %2286 = vdwg.mxu0
    %2287 = vmatprep.subr.bf16.mxu0 0
    %2288 = vmatpush1.bf16.msra.mxu0 %v1622
    %2289 = vmatprep.subr.bf16.mxu0 0
    %2290 = vmatpush1.bf16.msra.mxu0 %v1621
    %2291 = vmatprep.subr.bf16.mxu0 0
    %2292 = vmatpush1.bf16.msra.mxu0 %v1620
    %2293 = vmatprep.subr.bf16.mxu0 0
    %2294 = vmatpush1.bf16.msra.mxu0 %v1619
    %2295 = vmatprep.subr.bf16.mxu0 0
    %2296 = vmatpush1.bf16.msra.mxu0 %v1618
    %2297 = vmatprep.subr.bf16.mxu0 0
    %2298 = vmatpush1.bf16.msra.mxu0 %v1617
    %2299 = vmatprep.subr.bf16.mxu0 0
    %2300 = vmatpush1.bf16.msra.mxu0 %v1616
    %2301 = vmatprep.subr.bf16.mxu0 0
    %2302 = vmatpush1.bf16.msra.mxu0 %v1615
    %2303 = vmatprep.subr.bf16.mxu0 0
    %2304 = vmatpush2.bf16.msra.mxu0 %v1630
    %2305 = vmatprep.subr.bf16.mxu0 0
    %2306 = vmatpush2.bf16.msra.mxu0 %v1629
    %2307 = vmatprep.subr.bf16.mxu0 0
    %2308 = vmatpush2.bf16.msra.mxu0 %v1628
    %2309 = vmatprep.subr.bf16.mxu0 0
    %2310 = vmatpush2.bf16.msra.mxu0 %v1627
    %2311 = vmatprep.subr.bf16.mxu0 0
    %2312 = vmatpush2.bf16.msra.mxu0 %v1626
    %2313 = vmatprep.subr.bf16.mxu0 0
    %2314 = vmatpush2.bf16.msra.mxu0 %v1625
    %2315 = vmatprep.subr.bf16.mxu0 0
    %2316 = vmatpush2.bf16.msra.mxu0 %v1624
    %2317 = vmatprep.subr.bf16.mxu0 0
    %2318 = vmatpush2.bf16.msra.mxu0 %v1623
    %2319 = vmatprep.mubr.bf16.mxu0 %v626
    %2320 = vmatmul.mubr.bf16.gmra.mxu0 %v625
    %v2321 = vpop.f32.mrf.mxu0
    %v2322 = vadd.f32 %v2274, %v2321
    %v2323 = vpop.f32.mrf.mxu0
    %v2324 = vpop.f32.mrf.mxu0
    %v2325 = vadd.f32 %v2277, %v2324
    %v2326 = vpop.f32.mrf.mxu0
    %2327 = vmatprep.mubr.bf16.mxu0 %v650
    %2328 = vmatmul.mubr.bf16.gmra.mxu0 %v649
    %v2329 = vpop.f32.mrf.mxu0
    %v2330 = vadd.f32 %v2282, %v2329
    %v2331 = vpop.f32.mrf.mxu0
    %v2332 = vpop.f32.mrf.mxu0
    %v2333 = vpop.f32.mrf.mxu0
    %2334 = vdwg.mxu0
    %2335 = vmatprep.subr.bf16.mxu0 0
    %2336 = vmatpush1.bf16.msra.mxu0 %v1638
    %2337 = vmatprep.subr.bf16.mxu0 0
    %2338 = vmatpush1.bf16.msra.mxu0 %v1637
    %2339 = vmatprep.subr.bf16.mxu0 0
    %2340 = vmatpush1.bf16.msra.mxu0 %v1636
    %2341 = vmatprep.subr.bf16.mxu0 0
    %2342 = vmatpush1.bf16.msra.mxu0 %v1635
    %2343 = vmatprep.subr.bf16.mxu0 0
    %2344 = vmatpush1.bf16.msra.mxu0 %v1634
    %2345 = vmatprep.subr.bf16.mxu0 0
    %2346 = vmatpush1.bf16.msra.mxu0 %v1633
    %2347 = vmatprep.subr.bf16.mxu0 0
    %2348 = vmatpush1.bf16.msra.mxu0 %v1632
    %2349 = vmatprep.subr.bf16.mxu0 0
    %2350 = vmatpush1.bf16.msra.mxu0 %v1631
    %2351 = vmatprep.subr.bf16.mxu0 0
    %2352 = vmatpush2.bf16.msra.mxu0 %v1646
    %2353 = vmatprep.subr.bf16.mxu0 0
    %2354 = vmatpush2.bf16.msra.mxu0 %v1645
    %2355 = vmatprep.subr.bf16.mxu0 0
    %2356 = vmatpush2.bf16.msra.mxu0 %v1644
    %2357 = vmatprep.subr.bf16.mxu0 0
    %2358 = vmatpush2.bf16.msra.mxu0 %v1643
    %2359 = vmatprep.subr.bf16.mxu0 0
    %2360 = vmatpush2.bf16.msra.mxu0 %v1642
    %2361 = vmatprep.subr.bf16.mxu0 0
    %2362 = vmatpush2.bf16.msra.mxu0 %v1641
    %2363 = vmatprep.subr.bf16.mxu0 0
    %2364 = vmatpush2.bf16.msra.mxu0 %v1640
    %2365 = vmatprep.subr.bf16.mxu0 0
    %2366 = vmatpush2.bf16.msra.mxu0 %v1639
    %2367 = vmatprep.mubr.bf16.mxu0 %v628
    %2368 = vmatmul.mubr.bf16.gmra.mxu0 %v627
    %v2369 = vpop.f32.mrf.mxu0
    %v2370 = vadd.f32 %v2322, %v2369
    %v2371 = vpop.f32.mrf.mxu0
    %v2372 = vpop.f32.mrf.mxu0
    %v2373 = vadd.f32 %v2325, %v2372
    %v2374 = vpop.f32.mrf.mxu0
    %2375 = vmatprep.mubr.bf16.mxu0 %v652
    %2376 = vmatmul.mubr.bf16.gmra.mxu0 %v651
    %v2377 = vpop.f32.mrf.mxu0
    %v2378 = vadd.f32 %v2330, %v2377
    %v2379 = vpop.f32.mrf.mxu0
    %v2380 = vpop.f32.mrf.mxu0
    %v2381 = vpop.f32.mrf.mxu0
    %2382 = vdwg.mxu0
    %2383 = vmatprep.subr.bf16.mxu0 0
    %2384 = vmatpush1.bf16.msra.mxu0 %v1654
    %2385 = vmatprep.subr.bf16.mxu0 0
    %2386 = vmatpush1.bf16.msra.mxu0 %v1653
    %2387 = vmatprep.subr.bf16.mxu0 0
    %2388 = vmatpush1.bf16.msra.mxu0 %v1652
    %2389 = vmatprep.subr.bf16.mxu0 0
    %2390 = vmatpush1.bf16.msra.mxu0 %v1651
    %2391 = vmatprep.subr.bf16.mxu0 0
    %2392 = vmatpush1.bf16.msra.mxu0 %v1650
    %2393 = vmatprep.subr.bf16.mxu0 0
    %2394 = vmatpush1.bf16.msra.mxu0 %v1649
    %2395 = vmatprep.subr.bf16.mxu0 0
    %2396 = vmatpush1.bf16.msra.mxu0 %v1648
    %2397 = vmatprep.subr.bf16.mxu0 0
    %2398 = vmatpush1.bf16.msra.mxu0 %v1647
    %2399 = vmatprep.subr.bf16.mxu0 0
    %2400 = vmatpush2.bf16.msra.mxu0 %v1662
    %2401 = vmatprep.subr.bf16.mxu0 0
    %2402 = vmatpush2.bf16.msra.mxu0 %v1661
    %2403 = vmatprep.subr.bf16.mxu0 0
    %2404 = vmatpush2.bf16.msra.mxu0 %v1660
    %2405 = vmatprep.subr.bf16.mxu0 0
    %2406 = vmatpush2.bf16.msra.mxu0 %v1659
    %2407 = vmatprep.subr.bf16.mxu0 0
    %2408 = vmatpush2.bf16.msra.mxu0 %v1658
    %2409 = vmatprep.subr.bf16.mxu0 0
    %2410 = vmatpush2.bf16.msra.mxu0 %v1657
    %2411 = vmatprep.subr.bf16.mxu0 0
    %2412 = vmatpush2.bf16.msra.mxu0 %v1656
    %2413 = vmatprep.subr.bf16.mxu0 0
    %2414 = vmatpush2.bf16.msra.mxu0 %v1655
    %2415 = vmatprep.mubr.bf16.mxu0 %v630
    %2416 = vmatmul.mubr.bf16.gmra.mxu0 %v629
    %v2417 = vpop.f32.mrf.mxu0
    %v2418 = vadd.f32 %v2370, %v2417
    %v2419 = vpop.f32.mrf.mxu0
    %v2420 = vpop.f32.mrf.mxu0
    %v2421 = vadd.f32 %v2373, %v2420
    %v2422 = vpop.f32.mrf.mxu0
    %2423 = vmatprep.mubr.bf16.mxu0 %v654
    %2424 = vmatmul.mubr.bf16.gmra.mxu0 %v653
    %v2425 = vpop.f32.mrf.mxu0
    %v2426 = vadd.f32 %v2378, %v2425
    %v2427 = vpop.f32.mrf.mxu0
    %v2428 = vpop.f32.mrf.mxu0
    %v2429 = vpop.f32.mrf.mxu0
    %2430 = vdwg.mxu0
    %v2431 = vmax.f32 %v2418, 0.0
    %v2432 = vmax.f32 %v2421, 0.0
    %v2433 = vmax.f32 %v2426, 0.0
    %v2434 = vpack.c.bf16 %v2432, %v2431
    %v2435 = vpack.c.bf16 %v2433, %v2433
    %v2436 = vld [vmem:[#allocation7] sm:$0xf]
    %v2437 = vld [vmem:[#allocation7 + $0x4] sm:$0xf]
    %v2438 = vld [vmem:[#allocation7 + $0x8] sm:$0xf]
    %v2439 = vld [vmem:[#allocation7 + $0xc] sm:$0xf]
    %v2440 = vld [vmem:[#allocation7 + $0x10] sm:$0xf]
    %v2441 = vld [vmem:[#allocation7 + $0x14] sm:$0xf]
    %v2442 = vld [vmem:[#allocation7 + $0x18] sm:$0xf]
    %v2443 = vld [vmem:[#allocation7 + $0x1c] sm:$0xf]
    %v2444 = vld [vmem:[#allocation7 + $0x20] sm:$0xf]
    %v2445 = vld [vmem:[#allocation7 + $0x24] sm:$0xf]
    %v2446 = vld [vmem:[#allocation7 + $0x28] sm:$0xf]
    %v2447 = vld [vmem:[#allocation7 + $0x2c] sm:$0xf]
    %v2448 = vld [vmem:[#allocation7 + $0x30] sm:$0xf]
    %v2449 = vld [vmem:[#allocation7 + $0x34] sm:$0xf]
    %v2450 = vld [vmem:[#allocation7 + $0x38] sm:$0xf]
    %v2451 = vld [vmem:[#allocation7 + $0x3c] sm:$0xf]
    %v2452 = vld [vmem:[%s4] sm:$0x1]
    %v2454 = vlaneseq
    %v2455 = vshrl.u32 %v2454, 7
    %v2456 = vsub.s32 0, %v2455
    %v2457 = vrot.slane %v2452, %v2456
    %v2475 = vunpack.c.l.b16 %v2436
    %v2476 = vunpack.c.l.b16 %v2437
    %v2477 = vunpack.c.l.b16 %v2438
    %v2478 = vunpack.c.l.b16 %v2439
    %v2479 = vunpack.c.l.b16 %v2440
    %v2480 = vunpack.c.l.b16 %v2441
    %v2481 = vunpack.c.l.b16 %v2442
    %v2482 = vunpack.c.l.b16 %v2443
    %v2483 = vunpack.c.l.b16 %v2444
    %v2484 = vunpack.c.l.b16 %v2445
    %v2485 = vunpack.c.l.b16 %v2446
    %v2486 = vunpack.c.l.b16 %v2447
    %v2487 = vunpack.c.l.b16 %v2448
    %v2488 = vunpack.c.l.b16 %v2449
    %v2489 = vunpack.c.l.b16 %v2450
    %v2490 = vunpack.c.l.b16 %v2451
    %v2491 = vpack.c.b16 %v2476, %v2475
    %v2492 = vpack.c.b16 %v2478, %v2477
    %v2493 = vpack.c.b16 %v2480, %v2479
    %v2494 = vpack.c.b16 %v2482, %v2481
    %v2495 = vpack.c.b16 %v2484, %v2483
    %v2496 = vpack.c.b16 %v2486, %v2485
    %v2497 = vpack.c.b16 %v2488, %v2487
    %v2498 = vpack.c.b16 %v2490, %v2489
    %2507 = vmatprep.subr.bf16.mxu0 0
    %2508 = vmatpush1.bf16.msra.mxu0 %v2498
    %2509 = vmatprep.subr.bf16.mxu0 0
    %2510 = vmatpush1.bf16.msra.mxu0 %v2497
    %2511 = vmatprep.subr.bf16.mxu0 0
    %2512 = vmatpush1.bf16.msra.mxu0 %v2496
    %2513 = vmatprep.subr.bf16.mxu0 0
    %2514 = vmatpush1.bf16.msra.mxu0 %v2495
    %2515 = vmatprep.subr.bf16.mxu0 0
    %2516 = vmatpush1.bf16.msra.mxu0 %v2494
    %2517 = vmatprep.subr.bf16.mxu0 0
    %2518 = vmatpush1.bf16.msra.mxu0 %v2493
    %2519 = vmatprep.subr.bf16.mxu0 0
    %2520 = vmatpush1.bf16.msra.mxu0 %v2492
    %2521 = vmatprep.subr.bf16.mxu0 0
    %2522 = vmatpush1.bf16.msra.mxu0 %v2491
    %2523 = vmatprep.subr.bf16.mxu0 0
    %2524 = vmatpush2.bf16.msra.mxu0 0
    %2525 = vmatprep.subr.bf16.mxu0 0
    %2526 = vmatpush2.bf16.msra.mxu0 0
    %2527 = vmatprep.subr.bf16.mxu0 0
    %2528 = vmatpush2.bf16.msra.mxu0 0
    %2529 = vmatprep.subr.bf16.mxu0 0
    %2530 = vmatpush2.bf16.msra.mxu0 0
    %2531 = vmatprep.subr.bf16.mxu0 0
    %2532 = vmatpush2.bf16.msra.mxu0 0
    %2533 = vmatprep.subr.bf16.mxu0 0
    %2534 = vmatpush2.bf16.msra.mxu0 0
    %2535 = vmatprep.subr.bf16.mxu0 0
    %2536 = vmatpush2.bf16.msra.mxu0 0
    %2537 = vmatprep.subr.bf16.mxu0 0
    %2538 = vmatpush2.bf16.msra.mxu0 0
    %2539 = vmatprep.mubr.bf16.mxu0 0
    %2540 = vmatmul.mubr.bf16.gmra.mxu0 %v2434
    %v2541 = vpop.f32.mrf.mxu0
    %v2542 = vadd.f32 %v2457, %v2541
    %v2543 = vpop.f32.mrf.mxu0
    %v2544 = vpop.f32.mrf.mxu0
    %v2545 = vadd.f32 %v2457, %v2544
    %v2546 = vpop.f32.mrf.mxu0
    %2547 = vmatprep.mubr.bf16.mxu0 0
    %2548 = vmatmul.mubr.bf16.gmra.mxu0 %v2435
    %v2549 = vpop.f32.mrf.mxu0
    %v2550 = vadd.f32 %v2457, %v2549
    %v2551 = vpop.f32.mrf.mxu0
    %v2552 = vpop.f32.mrf.mxu0
    %v2553 = vpop.f32.mrf.mxu0
    %2554 = vdwg.mxu0
    %2555 = vmax.xlane.f32.xlu0 %v2542
    %v2556 = vpop.xlane.xlu0 %2555
    %v2557 = vsub.f32 %v2542, %v2556
    %v2558 = vmul.f32 %v2557, 1.442695
    %v2559 = vpow.pop %v2558
    %2560 = vadd.xlane.f32.xlu0 %v2559
    %v2561 = vpop.xlane.xlu0 %2560
    %v2562 = vrcp.pop %v2561
    %v2563 = vmul.f32 %v2559, %v2562
    %2564 = vst [vmem:[#allocation8] sm:$0xff] %v2563
    %v2565 = vld [vmem:[%s5] sm:$0xf]
    %v2566 = vlaneseq
    %v2567 = vand.u32 %v2566, 127
    %2568 = vset.pattern.permute.xlu0 0
    %2569 = vperm.xlu0 %2568, %v2565
    %v2570 = vpop.permute.xlu0 %2569
    %vm2571 = vcmp.eq.s32.totalorder %v2567, %v2570
    %vm2572 = vcmask 1043456
    %v2573 = vsel %vm2572, %v2542, -inf
    %2574 = vmax.xlane.f32.xlu0 %v2573
    %v2575 = vpop.xlane.xlu0 %2574
    %v2576 = vsub.f32 %v2542, %v2575
    %v2577 = vmul.f32 %v2576, 1.442695
    %v2578 = vpow.pop %v2577
    %v2579 = vsel %vm2572, %v2578, 0.0
    %2580 = vadd.xlane.f32.xlu0 %v2579
    %v2581 = vpop.xlane.xlu0 %2580
    %v2582 = vlog2.pop %v2581
    %v2583 = vmul.f32 %v2582, 0.6931472
    %v2584 = vadd.f32 %v2575, %v2583
    %v2585 = vsel %vm2571, %v2542, 0.0
    %v2586 = vsel %vm2572, %v2585, 0.0
    %2587 = vadd.xlane.f32.xlu0 %v2586
    %v2588 = vpop.xlane.xlu0 %2587
    %v2589 = vsub.f32 %v2584, %v2588
    %v2590 = vadd.f32 %v2589, 0.0
    %v2591 = vsel %vm2572, %v2590, 0.0
    %v2592 = vrot.slane %v2591, 4
    %v2593 = vadd.f32 %v2591, %v2592
    %v2594 = vrot.slane %v2593, 2
    %v2595 = vadd.f32 %v2593, %v2594
    %v2596 = vrot.slane %v2595, 1
    %v2597 = vadd.f32 %v2595, %v2596
    %v2598 = vmul.f32 %v2597, 0.25
    %v2599 = vrot.slane %v2563, 4
    %v2600 = vadd.f32 %v2563, %v2599
    %v2601 = vrot.slane %v2600, 2
    %v2602 = vadd.f32 %v2600, %v2601
    %v2603 = vrot.slane %v2602, 1
    %v2604 = vadd.f32 %v2602, %v2603
    %v2605 = vmul.f32 %v2604, 0.125
    %v2606 = vadd.f32 %v2605, 1e-10
    %v2607 = vlog2.pop %v2606
    %v2608 = vmul.f32 %v2607, 0.6931472
    %v2609 = vmul.f32 %v2605, %v2608
    %2610 = vadd.xlane.f32.xlu0 %v2609
    %v2611 = vpop.xlane.xlu0 %2610
    %v2612 = vsub.f32 0.0, %v2611
    %2613 = vmax.xlane.f32.xlu0 %v2545
    %v2614 = vpop.xlane.xlu0 %2613
    %vm2615 = vcmp.ge.f32.partialorder %v2545, %v2614
    %v2616 = vsel %vm2615, %v2567, 128
    %v2617 = vand.u32 %v2616, 65535
    %v2618 = vshra.s32 %v2616, 16
    %v2619 = vcvt.s32.f32 %v2617
    %v2620 = vcvt.s32.f32 %v2618
    %2621 = vmin.xlane.f32.xlu0 %v2620
    %v2622 = vpop.xlane.xlu0 %2621
    %vm2623 = vcmp.eq.f32.partialorder %v2620, %v2622
    %v2624 = vsel %vm2623, %v2619, inf
    %2625 = vmin.xlane.f32.xlu0 %v2624
    %v2626 = vpop.xlane.xlu0 %2625
    %v2627 = vcvt.f32.s32 %v2626
    %v2628 = vcvt.f32.s32 %v2622
    %v2629 = vshll.u32 %v2628, 16
    %v2630 = vadd.s32 %v2629, %v2627
    %2631 = vmax.xlane.f32.xlu0 %v2550
    %v2632 = vpop.xlane.xlu0 %2631
    %vm2633 = vcmp.ge.f32.partialorder %v2550, %v2632
    %v2634 = vsel %vm2633, %v2567, 128
    %v2635 = vand.u32 %v2634, 65535
    %v2636 = vshra.s32 %v2634, 16
    %v2637 = vcvt.s32.f32 %v2635
    %v2638 = vcvt.s32.f32 %v2636
    %2639 = vmin.xlane.f32.xlu0 %v2638
    %v2640 = vpop.xlane.xlu0 %2639
    %vm2641 = vcmp.eq.f32.partialorder %v2638, %v2640
    %v2642 = vsel %vm2641, %v2637, inf
    %2643 = vmin.xlane.f32.xlu0 %v2642
    %v2644 = vpop.xlane.xlu0 %2643
    %v2645 = vcvt.f32.s32 %v2644
    %v2646 = vcvt.f32.s32 %v2640
    %v2647 = vshll.u32 %v2646, 16
    %v2648 = vadd.s32 %v2647, %v2645
    %vm2649 = vcmp.eq.s32.totalorder %v2630, %v2648
    %vm2650 = vcmp.lt.s32.totalorder %v2648, 5
    %vm2651 = vmand %vm2649, %vm2650
    %v2652 = vsel %vm2651, 1, 0
    %v2653 = vcvt.s32.f32 %v2652
    %v2654 = vadd.f32 %v2653, 0.0
    %v2655 = vsel %vm2572, %v2654, 0.0
    %v2656 = vrot.slane %v2655, 4
    %v2657 = vadd.f32 %v2655, %v2656
    %v2658 = vrot.slane %v2657, 2
    %v2659 = vadd.f32 %v2657, %v2658
    %v2660 = vrot.slane %v2659, 1
    %v2661 = vadd.f32 %v2659, %v2660
    %v2662 = vmul.f32 %v2661, 0.25
    %v2663 = vld [vmem:[%s6] sm:$0xf]
    %vm2664 = vcmp.lt.s32.totalorder %v2663, 5
    %vm2665 = vcmp.lt.s32.totalorder %v2630, 5
    %vm2666 = vmand %vm2649, %vm2665
    %v2667 = vsel %vm2664, 1, 0
    %v2668 = vrot.slane %v2667, 4
    %vm2669 = vcmp.ne.s32.totalorder %v2668, 0
    %vm2670 = vmand %vm2666, %vm2669
    %v2671 = vsel %vm2670, 1, 0
    %v2672 = vcvt.s32.f32 %v2671
    %v2673 = vadd.f32 %v2672, 0.0
    %v2675 = vrot.slane %v2673, 4
    %vm2677 = vcmask 3072
    %v2678 = vsel %vm2677, %v2675, 0.0
    %v2679 = vrot.slane %v2678, 4
    %v2680 = vadd.f32 %v2678, %v2679
    %v2681 = vrot.slane %v2680, 2
    %v2682 = vadd.f32 %v2680, %v2681
    %v2683 = vrot.slane %v2682, 1
    %v2684 = vadd.f32 %v2682, %v2683
    %v2685 = vcvt.s32.f32 %v2667
    %v2686 = vadd.f32 %v2685, 0.0
    %v2687 = vsel %vm2677, %v2686, 0.0
    %v2688 = vrot.slane %v2687, 4
    %v2689 = vadd.f32 %v2687, %v2688
    %v2690 = vrot.slane %v2689, 2
    %v2691 = vadd.f32 %v2689, %v2690
    %v2692 = vrot.slane %v2691, 1
    %v2693 = vadd.f32 %v2691, %v2692
    %v2694 = vsub.f32 4.0, %v2693
    %v2695 = vmax.f32 %v2693, 1.0
    %v2696 = vrcp.pop %v2695
    %v2697 = vmax.f32 %v2694, 1.0
    %v2698 = vrcp.pop %v2697
    %vm2699 = vcmp.gt.f32.partialorder %v2693, 0.0
    %v2700 = vmul.f32 %v2684, %v2696
    %v2701 = vsel %vm2699, %v2700, 0.0
    %vm2702 = vcmp.gt.f32.partialorder %v2694, 0.0
    %v2703 = vmul.f32 %v2684, %v2698
    %v2704 = vsel %vm2702, %v2703, 0.0
    %vm2705 = vcmp.eq.s32.totalorder %v2567, 0
    %v2706 = vsel %vm2705, %v2598, 0.0
    %vm2707 = vcmp.eq.s32.totalorder %v2567, 1
    %v2708 = vsel %vm2707, %v2612, 0.0
    %v2709 = vadd.f32 %v2706, %v2708
    %vm2710 = vcmp.eq.s32.totalorder %v2567, 2
    %v2711 = vsel %vm2710, %v2662, 0.0
    %v2712 = vadd.f32 %v2709, %v2711
    %vm2713 = vcmp.eq.s32.totalorder %v2567, 3
    %2715 = vset.pattern.permute.xlu0 0
    %2716 = vperm.xlu0 %2715, %v2704
    %v2717 = vpop.permute.xlu0 %2716
    %v2719 = vsel %vm2713, %v2717, 0.0
    %v2720 = vadd.f32 %v2712, %v2719
    %vm2721 = vcmp.eq.s32.totalorder %v2567, 4
    %2723 = vset.pattern.permute.xlu0 0
    %2724 = vperm.xlu0 %2723, %v2701
    %v2725 = vpop.permute.xlu0 %2724
    %v2727 = vsel %vm2721, %v2725, 0.0
    %v2728 = vadd.f32 %v2720, %v2727
    %2729 = vst [vmem:[#allocation9] sm:$0x1] %v2728
    // Predicated region
    $region42: #{tpu_custom_call.1} parent=1 // pred_check
      _
    $region43: #{tpu_custom_call.1} parent=1 // pred_check_branch
      %2731 = sbr.rel (0) target = $region45
    $region44: #{tpu_custom_call.1} parent=1 // pred_region
      %s2733 = ssub.s32 128, 128
      %2734 = vsyncadd [#allocation4], %s2733
      %s2736 = sshll.u32 [#allocation8], 4
      %s2737 = int_to_ptr.vmem [resolvable:$true] %s2736
      %2739 = dma.vmem_to_hbm [thread:$0]  %s2737, 128, %s7, [#allocation4]
    $region45: #{tpu_custom_call.1} parent=1 // pred_fallthru
      _
    // Predicated region
    $region46: #{tpu_custom_call.1} parent=1 // pred_check
      _
    $region47: #{tpu_custom_call.1} parent=1 // pred_check_branch
      %2741 = sbr.rel (0) target = $region49
    $region48: #{tpu_custom_call.1} parent=1 // pred_region
      %s2743 = ssub.s32 16, 16
      %2744 = vsyncadd [#allocation10], %s2743
      %s2746 = sshll.u32 [#allocation9], 4
      %s2747 = int_to_ptr.vmem [resolvable:$true] %s2746
      %2749 = dma.vmem_to_hbm [thread:$0]  %s2747, 16, %s8, [#allocation10]
    $region49: #{tpu_custom_call.1} parent=1 // pred_fallthru
      _
    // Predicated region
    $region50: #{tpu_custom_call.1} parent=1 // pred_check
      _
    $region51: #{tpu_custom_call.1} parent=1 // pred_check_branch
      %2751 = sbr.rel (0) target = $region53
    $region52: #{tpu_custom_call.1} parent=1 // pred_region
      %2752 = dma.done [#allocation4], 128
    $region53: #{tpu_custom_call.1} parent=1 // pred_fallthru
      _
    // Predicated region
    $region54: #{tpu_custom_call.1} parent=1 // pred_check
      _
    $region55: #{tpu_custom_call.1} parent=1 // pred_check_branch
      %2754 = sbr.rel (0) target = $region57
    $region56: #{tpu_custom_call.1} parent=1 // pred_region
      %2755 = dma.done [#allocation10], 16
    $region57: #{tpu_custom_call.1} parent=1 // pred_fallthru
      _
    %2756 = vsyncpa [#allocation3], 1
    %2757 = vsyncpa [#allocation6], 1
    %2758 = vsyncpa [#allocation4], 1
    %2759 = vsyncpa [#allocation10], 1

</llo_original>
